<compile_context>
chip_gen: v5e
topology: v5e:2x2
jax: 0.10.0
libtpu: 0.0.40
codegen_flags: <defaults>
</compile_context>

<pallas_src>
from functools import partial

import jax
import jax.numpy as jnp
from jax import lax
from jax.experimental import pallas as pl
from jax.experimental.pallas import tpu as pltpu

LEAKY_SLOPE = 0.001
BN_EPS = 1e-5


def _bottleneck_kernel(H, W, x_ref, w1_ref, b1_ref, w2_ref, b2_ref,
                       wf1_ref, bf1_ref, wf2_ref, bf2_ref,
                       w3_ref, b3_ref, o_ref):
    """One grid step == one batch element; the full image lives in VMEM."""
    x = x_ref[0]                                   # (H*W, Cin) float32
    P = w1_ref.shape[1]                            # planes

    # ---- conv1: 1x1 conv (bf16 MXU operands, f32 acc) + bias + leaky_relu ----
    y = jnp.dot(x.astype(jnp.bfloat16), w1_ref[...],
                preferred_element_type=jnp.float32)
    y = y + b1_ref[...]
    y = jnp.where(y > 0, y, LEAKY_SLOPE * y)       # (H*W, P) f32

    # ---- conv2: 3x3, stride 1, pad 1 -----------------------------------------
    # One sublane-shifted slice per kw tap; the three kh taps are stacked along
    # the channel axis so each kw tap is a single (H*W, 3P) x (3P, P) MXU dot.
    yp = jnp.pad(y.reshape(H, W, P), ((1, 1), (1, 1), (0, 0)))   # (H+2, W+2, P)
    w2 = w2_ref[...]                               # (3, 3P, P) bf16, kw-major slabs
    acc = None
    for kw in range(3):
        col = yp[:, kw:kw + W, :]                  # (H+2, W, P): one sublane shift
        patch = jnp.concatenate(                   # (H, W, 3P): kh merged into K
            [col[0:H], col[1:H + 1], col[2:H + 2]], axis=-1)
        d = jnp.dot(patch.reshape(H * W, 3 * P).astype(jnp.bfloat16), w2[kw],
                    preferred_element_type=jnp.float32)
        acc = d if acc is None else acc + d        # init from first tap, no zeros
    y = acc + b2_ref[...]
    y = jnp.where(y > 0, y, LEAKY_SLOPE * y)       # (H*W, P) f32

    # ---- SE: global avg pool -> fc1 + relu -> fc2 + sigmoid -> scale (f32) ----
    se = jnp.sum(y, axis=0, keepdims=True) * (1.0 / (H * W))     # (1, P)
    h = jnp.dot(se, wf1_ref[...], preferred_element_type=jnp.float32) + bf1_ref[...]
    h = jnp.maximum(h, 0.0)
    g = jnp.dot(h, wf2_ref[...], preferred_element_type=jnp.float32) + bf2_ref[...]
    y = y * jax.nn.sigmoid(g)                      # (H*W, P) f32

    # ---- conv3: 1x1 conv + bias, residual add + relu (f32 epilogue) -----------
    y = jnp.dot(y.astype(jnp.bfloat16), w3_ref[...],
                preferred_element_type=jnp.float32)
    out = jnp.maximum(y + b3_ref[...] + x, 0.0)    # residual = x (downsample=None)
    o_ref[0] = out.astype(o_ref.dtype)


def bottleneck_forward(x_nchw, prep):
    """x_nchw: (B, Cin, H, W) float32 -> (B, Cout, H, W) float32."""
    B, Cin, H, W = x_nchw.shape
    x = jnp.transpose(x_nchw, (0, 2, 3, 1)).reshape(B, H * W, Cin)  # lane-dense
    P = prep["w1"].shape[1]
    R = prep["wf1"].shape[1]
    Cout = prep["w3"].shape[1]

    def const(shape):                     # full-array block, constant index map
        return pl.BlockSpec(shape, lambda b, _n=len(shape): (0,) * _n)

    grid_spec = pltpu.PrefetchScalarGridSpec(
        num_scalar_prefetch=0,
        grid=(B,),
        in_specs=[
            pl.BlockSpec((1, H * W, Cin), lambda b: (b, 0, 0)),
            const((Cin, P)), const((1, P)),            # w1 (bf16, scale folded), b1
            const((3, 3 * P, P)), const((1, P)),       # w2 kw-major slabs (bf16), b2
            const((P, R)), const((1, R)),              # SE fc1 (f32)
            const((R, P)), const((1, P)),              # SE fc2 (f32)
            const((P, Cout)), const((1, Cout)),        # w3 (bf16, scale folded), b3
        ],
        out_specs=pl.BlockSpec((1, H * W, Cout), lambda b: (b, 0, 0)),
    )

    flops = 2 * B * H * W * (Cin * P + 9 * P * P + P * Cout) + 4 * B * P * R
    bytes_accessed = (4 * B * H * W * (Cin + Cout)
                      + sum(int(v.size) * v.dtype.itemsize
                            for k, v in prep.items() if k != "w2_hwio"))

    out = pl.pallas_call(
        partial(_bottleneck_kernel, H, W),
        out_shape=jax.ShapeDtypeStruct((B, H * W, Cout), jnp.float32),
        grid_spec=grid_spec,
        compiler_params=pltpu.CompilerParams(
            dimension_semantics=("parallel",)),
        cost_estimate=pl.CostEstimate(flops=flops, transcendentals=B * P,
                                      bytes_accessed=bytes_accessed),
    )(x,
      prep["w1"], prep["b1"], prep["w2_slab"], prep["b2"],
      prep["wf1"], prep["bf1"], prep["wf2"], prep["bf2"],
      prep["w3"], prep["b3"])

    return jnp.transpose(out.reshape(B, H, W, Cout), (0, 3, 1, 2))


def _fold_bn(gamma, beta, mean, var):
    scale = gamma / jnp.sqrt(var + BN_EPS)
    bias = beta - mean * scale
    return scale.reshape(1, -1), bias.reshape(1, -1)


def init_params(key, inplanes, planes, expansion=4):
    """Raw f32 parameters mirroring the PyTorch module (eval-mode BN folded)."""
    Cout = planes * expansion
    assert Cout == inplanes, "downsample=None requires inplanes == planes*4"
    R = max(Cout // 8, 64)                          # reduce_layer_planes
    ks = jax.random.split(key, 16)

    def bn(k, c):
        k1, k2, k3, k4 = jax.random.split(k, 4)
        gamma = jax.random.uniform(k1, (c,), minval=0.5, maxval=1.5)
        beta = 0.1 * jax.random.normal(k2, (c,))
        mean = 0.1 * jax.random.normal(k3, (c,))
        var = jax.random.uniform(k4, (c,), minval=0.5, maxval=1.5)
        return _fold_bn(gamma, beta, mean, var)

    s1, b1 = bn(ks[0], planes)
    s2, b2 = bn(ks[1], planes)
    s3, b3 = bn(ks[2], Cout)
    return dict(
        w1=0.2 * jax.random.normal(ks[3], (inplanes, planes)),      # 1x1, (Cin,P)
        s1=s1, b1=b1,
        w2=0.2 * jax.random.normal(ks[4], (3, 3, planes, planes)),  # 3x3, HWIO
        s2=s2, b2=b2,
        wf1=0.2 * jax.random.normal(ks[5], (planes, R)),
        bf1=0.1 * jax.random.normal(ks[6], (1, R)),
        wf2=0.2 * jax.random.normal(ks[7], (R, planes)),
        bf2=0.1 * jax.random.normal(ks[8], (1, planes)),
        w3=0.2 * jax.random.normal(ks[9], (planes, Cout)),          # 1x1, (P,Cout)
        s3=s3, b3=b3,
    )


def prepare_params(raw):
    """Fold BN scales into the conv weights (along the OUTPUT-channel axis) and
    cast matmul weights to bf16; biases and SE params stay f32."""
    P = raw["w1"].shape[1]
    w1 = (raw["w1"] * raw["s1"].reshape(1, -1)).astype(jnp.bfloat16)
    w2 = (raw["w2"] * raw["s2"].reshape(1, 1, 1, -1)).astype(jnp.bfloat16)  # HWIO
    # slab[kw, kh*P + i, o] = w2[kh, kw, i, o]  (kh taps merged into the K dim)
    w2_slab = jnp.transpose(w2, (1, 0, 2, 3)).reshape(3, 3 * P, P)
    w3 = (raw["w3"] * raw["s3"].reshape(1, -1)).astype(jnp.bfloat16)
    return dict(
        w1=w1, b1=raw["b1"],
        w2_hwio=w2, w2_slab=w2_slab, b2=raw["b2"],
        wf1=raw["wf1"], bf1=raw["bf1"], wf2=raw["wf2"], bf2=raw["bf2"],
        w3=w3, b3=raw["b3"],
    )


def reference_forward(x_nchw, prep):
    """Pure-XLA reference of the SAME computation (bf16 matmul operands with f32
    accumulation, identical folded weights), used to validate the Pallas kernel."""
    x = jnp.transpose(x_nchw, (0, 2, 3, 1))         # (B,H,W,Cin) f32
    c = lambda a: a.reshape(1, 1, 1, -1)

    y = jnp.einsum("bhwc,cp->bhwp", x.astype(jnp.bfloat16), prep["w1"],
                   preferred_element_type=jnp.float32) + c(prep["b1"])
    y = jnp.where(y > 0, y, LEAKY_SLOPE * y)

    y = lax.conv_general_dilated(
        y.astype(jnp.bfloat16), prep["w2_hwio"], (1, 1), "SAME",
        dimension_numbers=("NHWC", "HWIO", "NHWC"),
        preferred_element_type=jnp.float32) + c(prep["b2"])
    y = jnp.where(y > 0, y, LEAKY_SLOPE * y)

    se = jnp.mean(y, axis=(1, 2), keepdims=True)
    h = jnp.maximum(jnp.einsum("bijp,pr->bijr", se, prep["wf1"]) + c(prep["bf1"]), 0.0)
    g = jax.nn.sigmoid(jnp.einsum("bijr,rp->bijp", h, prep["wf2"]) + c(prep["bf2"]))
    y = y * g

    y = jnp.einsum("bhwp,pc->bhwc", y.astype(jnp.bfloat16), prep["w3"],
                   preferred_element_type=jnp.float32) + c(prep["b3"])
    out = jnp.maximum(y + x, 0.0)
    return jnp.transpose(out, (0, 3, 1, 2))


if __name__ == "__main__":
    # Channel counts chosen as multiples of 128 so the kernel's HBM blocks are
    # lane-dense (per the perf review); downsample=None requires inplanes == 4*planes.
    B, planes, H, W = 2, 32, 16, 16
    inplanes = planes * 4                           # 128
    key = jax.random.PRNGKey(0)
    kx, kp = jax.random.split(key)
    x = jax.random.normal(kx, (B, inplanes, H, W), dtype=jnp.float32)
    raw = init_params(kp, inplanes, planes)
    prep = prepare_params(raw)

    out = jax.block_until_ready(bottleneck_forward(x, prep))
    ref = jax.block_until_ready(reference_forward(x, prep))

    assert out.shape == (B, inplanes, H, W)
    abs_err = jnp.abs(out - ref)
    max_err = float(jnp.max(abs_err))
    mean_err = float(jnp.mean(abs_err))
    # Kernel and reference use bit-identical bf16 operands; remaining differences
    # come from f32 accumulation order and the occasional bf16 cast of an
    # intermediate landing on the other side of a rounding boundary, so we bound
    # both the max and the mean error (a real bug would be orders of magnitude off).
    assert max_err < 1e-1 and mean_err < 1e-3, (max_err, mean_err)
    print("KERNEL_OK")
</pallas_src>

<mosaic_0001>
module attributes {stable_mosaic.version = 11 : i64} {
  func.func @_bottleneck_kernel(%arg0: i32, %arg1: memref<1x256x128xf32, #tpu.memory_space<vmem>>, %arg2: memref<128x32xbf16, #tpu.memory_space<vmem>>, %arg3: memref<1x32xf32, #tpu.memory_space<vmem>>, %arg4: memref<3x96x32xbf16, #tpu.memory_space<vmem>>, %arg5: memref<1x32xf32, #tpu.memory_space<vmem>>, %arg6: memref<32x64xf32, #tpu.memory_space<vmem>>, %arg7: memref<1x64xf32, #tpu.memory_space<vmem>>, %arg8: memref<64x32xf32, #tpu.memory_space<vmem>>, %arg9: memref<1x32xf32, #tpu.memory_space<vmem>>, %arg10: memref<32x128xbf16, #tpu.memory_space<vmem>>, %arg11: memref<1x128xf32, #tpu.memory_space<vmem>>, %arg12: memref<1x256x128xf32, #tpu.memory_space<vmem>>) attributes {dimension_semantics = [#tpu.dimension_semantics<parallel>], iteration_bounds = array<i64: 2>, scalar_prefetch = 0 : i64, scratch_operands = 0 : i64, tpu.core_type = #tpu.core_type<tc>, window_params = [{transform_indices = @transform_0, window_bounds = array<i64: 1, 256, 128>}, {pipeline_mode = #tpu.pipeline_mode<synchronous>, transform_indices = @transform_1, window_bounds = array<i64: 128, 32>}, {pipeline_mode = #tpu.pipeline_mode<synchronous>, transform_indices = @transform_2, window_bounds = array<i64: 1, 32>}, {pipeline_mode = #tpu.pipeline_mode<synchronous>, transform_indices = @transform_3, window_bounds = array<i64: 3, 96, 32>}, {pipeline_mode = #tpu.pipeline_mode<synchronous>, transform_indices = @transform_4, window_bounds = array<i64: 1, 32>}, {pipeline_mode = #tpu.pipeline_mode<synchronous>, transform_indices = @transform_5, window_bounds = array<i64: 32, 64>}, {pipeline_mode = #tpu.pipeline_mode<synchronous>, transform_indices = @transform_6, window_bounds = array<i64: 1, 64>}, {pipeline_mode = #tpu.pipeline_mode<synchronous>, transform_indices = @transform_7, window_bounds = array<i64: 64, 32>}, {pipeline_mode = #tpu.pipeline_mode<synchronous>, transform_indices = @transform_8, window_bounds = array<i64: 1, 32>}, {pipeline_mode = #tpu.pipeline_mode<synchronous>, transform_indices = @transform_9, window_bounds = array<i64: 32, 128>}, {pipeline_mode = #tpu.pipeline_mode<synchronous>, transform_indices = @transform_10, window_bounds = array<i64: 1, 128>}, {transform_indices = @transform_11, window_bounds = array<i64: 1, 256, 128>}]} {
    %c0 = arith.constant 0 : index
    %c0_0 = arith.constant 0 : index
    %c0_1 = arith.constant 0 : index
    %0 = vector.load %arg1[%c0, %c0_0, %c0_1] : memref<1x256x128xf32, #tpu.memory_space<vmem>>, vector<1x256x128xf32>
    %1 = vector.shape_cast %0 : vector<1x256x128xf32> to vector<256x128xf32>
    %2 = arith.truncf %1 : vector<256x128xf32> to vector<256x128xbf16>
    %c0_2 = arith.constant 0 : index
    %c0_3 = arith.constant 0 : index
    %3 = vector.load %arg2[%c0_2, %c0_3] : memref<128x32xbf16, #tpu.memory_space<vmem>>, vector<128x32xbf16>
    %cst = arith.constant dense<0.000000e+00> : vector<256x32xf32>
    %4 = tpu.matmul %2, %3, %cst {dimension_numbers = #tpu.dot_dimension_numbers<[1], [0], [0], [1], [0, 0, 1, 1], [], []>} : vector<256x128xbf16>, vector<128x32xbf16>, vector<256x32xf32> -> vector<256x32xf32>
    %c0_4 = arith.constant 0 : index
    %c0_5 = arith.constant 0 : index
    %5 = vector.load %arg3[%c0_4, %c0_5] : memref<1x32xf32, #tpu.memory_space<vmem>>, vector<1x32xf32>
    %6 = vector.broadcast %5 : vector<1x32xf32> to vector<256x32xf32>
    %7 = arith.addf %4, %6 : vector<256x32xf32>
    %cst_6 = arith.constant 0.000000e+00 : f32
    %8 = vector.broadcast %cst_6 : f32 to vector<256x32xf32>
    %9 = arith.cmpf ogt, %7, %8 : vector<256x32xf32>
    %cst_7 = arith.constant 1.000000e-03 : f32
    %10 = vector.broadcast %cst_7 : f32 to vector<256x32xf32>
    %11 = arith.mulf %10, %7 : vector<256x32xf32>
    %12 = arith.select %9, %7, %11 : vector<256x32xi1>, vector<256x32xf32>
    %13 = vector.shape_cast %12 : vector<256x32xf32> to vector<16x16x32xf32>
    %c0_i32 = arith.constant 0 : i32
    %14 = arith.sitofp %c0_i32 : i32 to f32
    %15 = vector.broadcast %14 : f32 to vector<1x16x32xf32>
    %16 = tpu.concatenate %15, %13 in 0 : vector<1x16x32xf32>, vector<16x16x32xf32> -> vector<17x16x32xf32>
    %17 = vector.broadcast %14 : f32 to vector<1x16x32xf32>
    %18 = tpu.concatenate %16, %17 in 0 : vector<17x16x32xf32>, vector<1x16x32xf32> -> vector<18x16x32xf32>
    %19 = vector.broadcast %14 : f32 to vector<18x1x32xf32>
    %20 = tpu.concatenate %19, %18 in 1 : vector<18x1x32xf32>, vector<18x16x32xf32> -> vector<18x17x32xf32>
    %21 = vector.broadcast %14 : f32 to vector<18x1x32xf32>
    %22 = tpu.concatenate %20, %21 in 1 : vector<18x17x32xf32>, vector<18x1x32xf32> -> vector<18x18x32xf32>
    %c0_8 = arith.constant 0 : index
    %c0_9 = arith.constant 0 : index
    %c0_10 = arith.constant 0 : index
    %23 = vector.load %arg4[%c0_8, %c0_9, %c0_10] : memref<3x96x32xbf16, #tpu.memory_space<vmem>>, vector<3x96x32xbf16>
    %24 = vector.extract_strided_slice %22 {offsets = [0, 0, 0], sizes = [18, 16, 32], strides = [1, 1, 1]} : vector<18x18x32xf32> to vector<18x16x32xf32>
    %25 = vector.extract_strided_slice %24 {offsets = [0, 0, 0], sizes = [16, 16, 32], strides = [1, 1, 1]} : vector<18x16x32xf32> to vector<16x16x32xf32>
    %26 = vector.extract_strided_slice %24 {offsets = [1, 0, 0], sizes = [16, 16, 32], strides = [1, 1, 1]} : vector<18x16x32xf32> to vector<16x16x32xf32>
    %27 = vector.extract_strided_slice %24 {offsets = [2, 0, 0], sizes = [16, 16, 32], strides = [1, 1, 1]} : vector<18x16x32xf32> to vector<16x16x32xf32>
    %28 = tpu.concatenate %25, %26, %27 in 2 : vector<16x16x32xf32>, vector<16x16x32xf32>, vector<16x16x32xf32> -> vector<16x16x96xf32>
    %29 = vector.shape_cast %28 : vector<16x16x96xf32> to vector<256x96xf32>
    %30 = arith.truncf %29 : vector<256x96xf32> to vector<256x96xbf16>
    %31 = vector.extract_strided_slice %23 {offsets = [0, 0, 0], sizes = [1, 96, 32], strides = [1, 1, 1]} : vector<3x96x32xbf16> to vector<1x96x32xbf16>
    %32 = vector.shape_cast %31 : vector<1x96x32xbf16> to vector<96x32xbf16>
    %cst_11 = arith.constant dense<0.000000e+00> : vector<256x32xf32>
    %33 = tpu.matmul %30, %32, %cst_11 {dimension_numbers = #tpu.dot_dimension_numbers<[1], [0], [0], [1], [0, 0, 1, 1], [], []>} : vector<256x96xbf16>, vector<96x32xbf16>, vector<256x32xf32> -> vector<256x32xf32>
    %34 = vector.extract_strided_slice %22 {offsets = [0, 1, 0], sizes = [18, 16, 32], strides = [1, 1, 1]} : vector<18x18x32xf32> to vector<18x16x32xf32>
    %35 = vector.extract_strided_slice %34 {offsets = [0, 0, 0], sizes = [16, 16, 32], strides = [1, 1, 1]} : vector<18x16x32xf32> to vector<16x16x32xf32>
    %36 = vector.extract_strided_slice %34 {offsets = [1, 0, 0], sizes = [16, 16, 32], strides = [1, 1, 1]} : vector<18x16x32xf32> to vector<16x16x32xf32>
    %37 = vector.extract_strided_slice %34 {offsets = [2, 0, 0], sizes = [16, 16, 32], strides = [1, 1, 1]} : vector<18x16x32xf32> to vector<16x16x32xf32>
    %38 = tpu.concatenate %35, %36, %37 in 2 : vector<16x16x32xf32>, vector<16x16x32xf32>, vector<16x16x32xf32> -> vector<16x16x96xf32>
    %39 = vector.shape_cast %38 : vector<16x16x96xf32> to vector<256x96xf32>
    %40 = arith.truncf %39 : vector<256x96xf32> to vector<256x96xbf16>
    %41 = vector.extract_strided_slice %23 {offsets = [1, 0, 0], sizes = [1, 96, 32], strides = [1, 1, 1]} : vector<3x96x32xbf16> to vector<1x96x32xbf16>
    %42 = vector.shape_cast %41 : vector<1x96x32xbf16> to vector<96x32xbf16>
    %cst_12 = arith.constant dense<0.000000e+00> : vector<256x32xf32>
    %43 = tpu.matmul %40, %42, %cst_12 {dimension_numbers = #tpu.dot_dimension_numbers<[1], [0], [0], [1], [0, 0, 1, 1], [], []>} : vector<256x96xbf16>, vector<96x32xbf16>, vector<256x32xf32> -> vector<256x32xf32>
    %44 = arith.addf %33, %43 : vector<256x32xf32>
    %45 = vector.extract_strided_slice %22 {offsets = [0, 2, 0], sizes = [18, 16, 32], strides = [1, 1, 1]} : vector<18x18x32xf32> to vector<18x16x32xf32>
    %46 = vector.extract_strided_slice %45 {offsets = [0, 0, 0], sizes = [16, 16, 32], strides = [1, 1, 1]} : vector<18x16x32xf32> to vector<16x16x32xf32>
    %47 = vector.extract_strided_slice %45 {offsets = [1, 0, 0], sizes = [16, 16, 32], strides = [1, 1, 1]} : vector<18x16x32xf32> to vector<16x16x32xf32>
    %48 = vector.extract_strided_slice %45 {offsets = [2, 0, 0], sizes = [16, 16, 32], strides = [1, 1, 1]} : vector<18x16x32xf32> to vector<16x16x32xf32>
    %49 = tpu.concatenate %46, %47, %48 in 2 : vector<16x16x32xf32>, vector<16x16x32xf32>, vector<16x16x32xf32> -> vector<16x16x96xf32>
    %50 = vector.shape_cast %49 : vector<16x16x96xf32> to vector<256x96xf32>
    %51 = arith.truncf %50 : vector<256x96xf32> to vector<256x96xbf16>
    %52 = vector.extract_strided_slice %23 {offsets = [2, 0, 0], sizes = [1, 96, 32], strides = [1, 1, 1]} : vector<3x96x32xbf16> to vector<1x96x32xbf16>
    %53 = vector.shape_cast %52 : vector<1x96x32xbf16> to vector<96x32xbf16>
    %cst_13 = arith.constant dense<0.000000e+00> : vector<256x32xf32>
    %54 = tpu.matmul %51, %53, %cst_13 {dimension_numbers = #tpu.dot_dimension_numbers<[1], [0], [0], [1], [0, 0, 1, 1], [], []>} : vector<256x96xbf16>, vector<96x32xbf16>, vector<256x32xf32> -> vector<256x32xf32>
    %55 = arith.addf %44, %54 : vector<256x32xf32>
    %c0_14 = arith.constant 0 : index
    %c0_15 = arith.constant 0 : index
    %56 = vector.load %arg5[%c0_14, %c0_15] : memref<1x32xf32, #tpu.memory_space<vmem>>, vector<1x32xf32>
    %57 = vector.broadcast %56 : vector<1x32xf32> to vector<256x32xf32>
    %58 = arith.addf %55, %57 : vector<256x32xf32>
    %cst_16 = arith.constant 0.000000e+00 : f32
    %59 = vector.broadcast %cst_16 : f32 to vector<256x32xf32>
    %60 = arith.cmpf ogt, %58, %59 : vector<256x32xf32>
    %cst_17 = arith.constant 1.000000e-03 : f32
    %61 = vector.broadcast %cst_17 : f32 to vector<256x32xf32>
    %62 = arith.mulf %61, %58 : vector<256x32xf32>
    %63 = arith.select %60, %58, %62 : vector<256x32xi1>, vector<256x32xf32>
    %cst_18 = arith.constant dense<0.000000e+00> : vector<32xf32>
    %64 = vector.multi_reduction <add>, %63, %cst_18 [0] : vector<256x32xf32> to vector<32xf32>
    %65 = vector.shape_cast %64 : vector<32xf32> to vector<1x32xf32>
    %cst_19 = arith.constant 3.906250e-03 : f32
    %66 = vector.broadcast %cst_19 : f32 to vector<1x32xf32>
    %67 = arith.mulf %65, %66 : vector<1x32xf32>
    %c0_20 = arith.constant 0 : index
    %c0_21 = arith.constant 0 : index
    %68 = vector.load %arg6[%c0_20, %c0_21] : memref<32x64xf32, #tpu.memory_space<vmem>>, vector<32x64xf32>
    %cst_22 = arith.constant dense<0.000000e+00> : vector<1x64xf32>
    %69 = tpu.matmul %67, %68, %cst_22 {dimension_numbers = #tpu.dot_dimension_numbers<[1], [0], [0], [1], [0, 0, 1, 1], [], []>} : vector<1x32xf32>, vector<32x64xf32>, vector<1x64xf32> -> vector<1x64xf32>
    %c0_23 = arith.constant 0 : index
    %c0_24 = arith.constant 0 : index
    %70 = vector.load %arg7[%c0_23, %c0_24] : memref<1x64xf32, #tpu.memory_space<vmem>>, vector<1x64xf32>
    %71 = arith.addf %69, %70 : vector<1x64xf32>
    %cst_25 = arith.constant 0.000000e+00 : f32
    %72 = vector.broadcast %cst_25 : f32 to vector<1x64xf32>
    %73 = arith.maximumf %71, %72 : vector<1x64xf32>
    %c0_26 = arith.constant 0 : index
    %c0_27 = arith.constant 0 : index
    %74 = vector.load %arg8[%c0_26, %c0_27] : memref<64x32xf32, #tpu.memory_space<vmem>>, vector<64x32xf32>
    %cst_28 = arith.constant dense<0.000000e+00> : vector<1x32xf32>
    %75 = tpu.matmul %73, %74, %cst_28 {dimension_numbers = #tpu.dot_dimension_numbers<[1], [0], [0], [1], [0, 0, 1, 1], [], []>} : vector<1x64xf32>, vector<64x32xf32>, vector<1x32xf32> -> vector<1x32xf32>
    %c0_29 = arith.constant 0 : index
    %c0_30 = arith.constant 0 : index
    %76 = vector.load %arg9[%c0_29, %c0_30] : memref<1x32xf32, #tpu.memory_space<vmem>>, vector<1x32xf32>
    %77 = arith.addf %75, %76 : vector<1x32xf32>
    %78 = arith.negf %77 : vector<1x32xf32>
    %79 = math.exp %78 : vector<1x32xf32>
    %cst_31 = arith.constant 1.000000e+00 : f32
    %80 = vector.broadcast %cst_31 : f32 to vector<1x32xf32>
    %81 = arith.addf %80, %79 : vector<1x32xf32>
    %82 = arith.divf %80, %81 : vector<1x32xf32>
    %83 = vector.broadcast %82 : vector<1x32xf32> to vector<256x32xf32>
    %84 = arith.mulf %63, %83 : vector<256x32xf32>
    %85 = arith.truncf %84 : vector<256x32xf32> to vector<256x32xbf16>
    %c0_32 = arith.constant 0 : index
    %c0_33 = arith.constant 0 : index
    %86 = vector.load %arg10[%c0_32, %c0_33] : memref<32x128xbf16, #tpu.memory_space<vmem>>, vector<32x128xbf16>
    %cst_34 = arith.constant dense<0.000000e+00> : vector<256x128xf32>
    %87 = tpu.matmul %85, %86, %cst_34 {dimension_numbers = #tpu.dot_dimension_numbers<[1], [0], [0], [1], [0, 0, 1, 1], [], []>} : vector<256x32xbf16>, vector<32x128xbf16>, vector<256x128xf32> -> vector<256x128xf32>
    %c0_35 = arith.constant 0 : index
    %c0_36 = arith.constant 0 : index
    %88 = vector.load %arg11[%c0_35, %c0_36] : memref<1x128xf32, #tpu.memory_space<vmem>>, vector<1x128xf32>
    %89 = vector.broadcast %88 : vector<1x128xf32> to vector<256x128xf32>
    %90 = arith.addf %87, %89 : vector<256x128xf32>
    %91 = arith.addf %90, %1 : vector<256x128xf32>
    %cst_37 = arith.constant 0.000000e+00 : f32
    %92 = vector.broadcast %cst_37 : f32 to vector<256x128xf32>
    %93 = arith.maximumf %91, %92 : vector<256x128xf32>
    %c0_38 = arith.constant 0 : index
    %c0_39 = arith.constant 0 : index
    %c0_40 = arith.constant 0 : index
    %94 = vector.load %arg12[%c0_38, %c0_39, %c0_40] : memref<1x256x128xf32, #tpu.memory_space<vmem>>, vector<1x256x128xf32>
    %95 = vector.shape_cast %94 : vector<1x256x128xf32> to vector<256x128xf32>
    %96 = vector.shape_cast %93 : vector<256x128xf32> to vector<1x256x128xf32>
    tpu.vector_store %arg12[%c0_38, %c0_39, %c0_40], %96 {strides = array<i32>} : memref<1x256x128xf32, #tpu.memory_space<vmem>>, vector<1x256x128xf32>,
    return
  }
  func.func @transform_0(%arg0: i32) -> (i32, i32, i32) {
    %c0_i32 = arith.constant 0 : i32
    %c0_i32_0 = arith.constant 0 : i32
    %c0_i32_1 = arith.constant 0 : i32
    return %arg0, %c0_i32, %c0_i32_0 : i32, i32, i32
  }
  func.func @transform_1(%arg0: i32) -> (i32, i32) {
    %c0_i32 = arith.constant 0 : i32
    %c0_i32_0 = arith.constant 0 : i32
    %c0_i32_1 = arith.constant 0 : i32
    return %c0_i32, %c0_i32_0 : i32, i32
  }
  func.func @transform_2(%arg0: i32) -> (i32, i32) {
    %c0_i32 = arith.constant 0 : i32
    %c0_i32_0 = arith.constant 0 : i32
    %c0_i32_1 = arith.constant 0 : i32
    return %c0_i32, %c0_i32_0 : i32, i32
  }
  func.func @transform_3(%arg0: i32) -> (i32, i32, i32) {
    %c0_i32 = arith.constant 0 : i32
    %c0_i32_0 = arith.constant 0 : i32
    %c0_i32_1 = arith.constant 0 : i32
    %c0_i32_2 = arith.constant 0 : i32
    return %c0_i32, %c0_i32_0, %c0_i32_1 : i32, i32, i32
  }
  func.func @transform_4(%arg0: i32) -> (i32, i32) {
    %c0_i32 = arith.constant 0 : i32
    %c0_i32_0 = arith.constant 0 : i32
    %c0_i32_1 = arith.constant 0 : i32
    return %c0_i32, %c0_i32_0 : i32, i32
  }
  func.func @transform_5(%arg0: i32) -> (i32, i32) {
    %c0_i32 = arith.constant 0 : i32
    %c0_i32_0 = arith.constant 0 : i32
    %c0_i32_1 = arith.constant 0 : i32
    return %c0_i32, %c0_i32_0 : i32, i32
  }
  func.func @transform_6(%arg0: i32) -> (i32, i32) {
    %c0_i32 = arith.constant 0 : i32
    %c0_i32_0 = arith.constant 0 : i32
    %c0_i32_1 = arith.constant 0 : i32
    return %c0_i32, %c0_i32_0 : i32, i32
  }
  func.func @transform_7(%arg0: i32) -> (i32, i32) {
    %c0_i32 = arith.constant 0 : i32
    %c0_i32_0 = arith.constant 0 : i32
    %c0_i32_1 = arith.constant 0 : i32
    return %c0_i32, %c0_i32_0 : i32, i32
  }
  func.func @transform_8(%arg0: i32) -> (i32, i32) {
    %c0_i32 = arith.constant 0 : i32
    %c0_i32_0 = arith.constant 0 : i32
    %c0_i32_1 = arith.constant 0 : i32
    return %c0_i32, %c0_i32_0 : i32, i32
  }
  func.func @transform_9(%arg0: i32) -> (i32, i32) {
    %c0_i32 = arith.constant 0 : i32
    %c0_i32_0 = arith.constant 0 : i32
    %c0_i32_1 = arith.constant 0 : i32
    return %c0_i32, %c0_i32_0 : i32, i32
  }
  func.func @transform_10(%arg0: i32) -> (i32, i32) {
    %c0_i32 = arith.constant 0 : i32
    %c0_i32_0 = arith.constant 0 : i32
    %c0_i32_1 = arith.constant 0 : i32
    return %c0_i32, %c0_i32_0 : i32, i32
  }
  func.func @transform_11(%arg0: i32) -> (i32, i32, i32) {
    %c0_i32 = arith.constant 0 : i32
    %c0_i32_0 = arith.constant 0 : i32
    %c0_i32_1 = arith.constant 0 : i32
    return %arg0, %c0_i32, %c0_i32_0 : i32, i32, i32
  }
}

</mosaic_0001>

<llo_original>
// kernel: tpu_custom_call.1
$region0: #{tpu_custom_call.1}
  #allocation0 [shape = 'u32[]', space=smem, size = 0x4, offset = 0x4, fixed_abs, tag = 'smem constant byte address 0x4 - core index']
  #allocation1 [shape = 'u32[72,128]{1,0:T(1,128)}', space=vmem, size = 0x9000, scoped, tag = 'internal scratch']
  %s0 = inlined_call_operand.hbm [shape: f32[2,256,128], index: 0, kind: input, shape index: {}]
  %s1 = inlined_call_operand.vmem [shape: bf16[128,32], index: 1, kind: input, shape index: {}]
  %s2 = inlined_call_operand.vmem [shape: f32[1,32], index: 2, kind: input, shape index: {}]
  %s3 = inlined_call_operand.vmem [shape: bf16[3,96,32], index: 3, kind: input, shape index: {}]
  %s4 = inlined_call_operand.vmem [shape: f32[1,32], index: 4, kind: input, shape index: {}]
  %s5 = inlined_call_operand.vmem [shape: f32[32,64], index: 5, kind: input, shape index: {}]
  %s6 = inlined_call_operand.vmem [shape: f32[1,64], index: 6, kind: input, shape index: {}]
  %s7 = inlined_call_operand.vmem [shape: f32[64,32], index: 7, kind: input, shape index: {}]
  %s8 = inlined_call_operand.vmem [shape: f32[1,32], index: 8, kind: input, shape index: {}]
  %s9 = inlined_call_operand.vmem [shape: bf16[32,128], index: 9, kind: input, shape index: {}]
  %s10 = inlined_call_operand.vmem [shape: f32[1,128], index: 10, kind: input, shape index: {}]
  %s11 = inlined_call_operand.hbm [shape: f32[2,256,128], index: 11, kind: output, shape index: {}]
  %s12 = sld [smem:[#allocation0]]
  $region81: #{tpu_custom_call.1} parent=0
    _
  %s14 = ssub.s32 1, %s12
  %s15 = scalar_select 0, %s14, %s12
  $region1: #{tpu_custom_call.1} parent=0
    #allocation2 [shape = 'u8[262144]{0}', space=vmem, size = 0x40000, scoped, tag = 'input window, operand 0']
    #allocation3 [shape = 's32[2]{0}', space=sflag, size = 0x8, scoped, tag = 'scoped memory for tpu_custom_call.1']
    #allocation4 [shape = 's32[2]{0}', space=sflag, size = 0x8, scoped, tag = 'scoped memory for tpu_custom_call.1']
    #allocation5 [shape = 'u8[262144]{0}', space=vmem, size = 0x40000, scoped, tag = 'output window, operand 0']
    %16 = vsyncpa [#allocation3], 0
    %s17 = scalar_lea.sflag [#allocation3], 1
    %18 = vsyncpa %s17, 0
    %19 = vsyncpa [#allocation4], 0
    %s20 = scalar_lea.sflag [#allocation4], 1
    %21 = vsyncpa %s20, 0
    loop: start=0, step=1, limit=4
    $region2: #{tpu_custom_call.1} parent=1 // loop_pre_header
      _
    $region3: #{tpu_custom_call.1} parent=1 // loop_header
      %s23 = sphi 0, %s27
      %p24 = scmp.ge.s32.totalorder %s23, 4
      %s33 = sphi 0, %s35
      %s36 = sphi 0, %s33
      %s37 = sphi 0, %s36
      %s53 = sphi 0, %s37
      %s57 = sphi 0, %s57
      %s59 = sphi 0, %s57
      %s60 = sphi 0, %s59
      %s74 = sphi 0, %s60
      %s78 = sphi 0, %s78
      %s80 = sphi 0, %s78
      %s81 = sphi 0, %s80
      %s95 = sphi 0, %s81
      %s99 = sphi 0, %s99
      %s101 = sphi 0, %s99
      %s102 = sphi 0, %s101
      %s116 = sphi 0, %s102
      %s120 = sphi 0, %s120
      %s122 = sphi 0, %s120
      %s123 = sphi 0, %s122
      %s137 = sphi 0, %s123
      %s141 = sphi 0, %s141
      %s143 = sphi 0, %s141
      %s144 = sphi 0, %s143
      %s158 = sphi 0, %s144
      %s162 = sphi 0, %s162
      %s164 = sphi 0, %s162
      %s165 = sphi 0, %s164
      %s179 = sphi 0, %s165
      %s183 = sphi 0, %s183
      %s185 = sphi 0, %s183
      %s186 = sphi 0, %s185
      %s200 = sphi 0, %s186
      %s204 = sphi 0, %s204
      %s206 = sphi 0, %s204
      %s207 = sphi 0, %s206
      %s221 = sphi 0, %s207
      %s225 = sphi 0, %s225
      %s227 = sphi 0, %s225
      %s228 = sphi 0, %s227
      %s242 = sphi 0, %s228
      %s246 = sphi 0, %s246
      %s248 = sphi 0, %s246
      %s249 = sphi 0, %s248
      %s263 = sphi 0, %s249
      %s269 = sphi 0, %s271
      %s272 = sphi 0, %s269
      %s273 = sphi 0, %s272
      %s289 = sphi 0, %s273
    $region4: #{tpu_custom_call.1} parent=1 // loop_header_branch
      %26 = sbr.rel (%p24) target = $region8
    $region5: #{tpu_custom_call.1} parent=1 // loop_body
      %s28 = ssub.s32 %s23, 1
      %s29 = ssub.s32 %s23, 2
      %s30 = sadd.s32 %s23, 1
      %s31 = ssub.s32 %s23, %s30
      %p32 = scmp.eq.s32.totalorder %s31, 0
      %s34 = sadd.s32 %s33, 1
      %s35 = scalar_select %p32, %s33, %s34
      %p38 = pneg %p32
      %p39 = scmp.eq.s32.totalorder %s23, 1
      %p40 = por %p38, %p39
      %p41 = scmp.ne.s32.totalorder %s33, %s36
      %p42 = scmp.eq.s32.totalorder %s23, 0
      %p43 = por %p41, %p42
      %p44 = scmp.ne.s32.totalorder %s33, %s36
      %p45 = scmp.eq.s32.totalorder %s28, 1
      %p46 = por %p44, %p45
      %p47 = scmp.ne.s32.totalorder %s36, %s37
      %p48 = scmp.eq.s32.totalorder %s28, 0
      %p49 = por %p47, %p48
      %p50 = scmp.ne.s32.totalorder %s36, %s37
      %p51 = scmp.eq.s32.totalorder %s29, 1
      %p52 = por %p50, %p51
      %p54 = scmp.ne.s32.totalorder %s37, %s53
      %p55 = scmp.eq.s32.totalorder %s29, 0
      %p56 = por %p54, %p55
      %s58 = sadd.s32 %s57, 1
      %p61 = scmp.eq.s32.totalorder %s23, 1
      %p62 = scmp.ne.s32.totalorder %s57, %s59
      %p63 = scmp.eq.s32.totalorder %s23, 0
      %p64 = por %p62, %p63
      %p65 = scmp.ne.s32.totalorder %s57, %s59
      %p66 = scmp.eq.s32.totalorder %s28, 1
      %p67 = por %p65, %p66
      %p68 = scmp.ne.s32.totalorder %s59, %s60
      %p69 = scmp.eq.s32.totalorder %s28, 0
      %p70 = por %p68, %p69
      %p71 = scmp.ne.s32.totalorder %s59, %s60
      %p72 = scmp.eq.s32.totalorder %s29, 1
      %p73 = por %p71, %p72
      %p75 = scmp.ne.s32.totalorder %s60, %s74
      %p76 = scmp.eq.s32.totalorder %s29, 0
      %p77 = por %p75, %p76
      %s79 = sadd.s32 %s78, 1
      %p82 = scmp.eq.s32.totalorder %s23, 1
      %p83 = scmp.ne.s32.totalorder %s78, %s80
      %p84 = scmp.eq.s32.totalorder %s23, 0
      %p85 = por %p83, %p84
      %p86 = scmp.ne.s32.totalorder %s78, %s80
      %p87 = scmp.eq.s32.totalorder %s28, 1
      %p88 = por %p86, %p87
      %p89 = scmp.ne.s32.totalorder %s80, %s81
      %p90 = scmp.eq.s32.totalorder %s28, 0
      %p91 = por %p89, %p90
      %p92 = scmp.ne.s32.totalorder %s80, %s81
      %p93 = scmp.eq.s32.totalorder %s29, 1
      %p94 = por %p92, %p93
      %p96 = scmp.ne.s32.totalorder %s81, %s95
      %p97 = scmp.eq.s32.totalorder %s29, 0
      %p98 = por %p96, %p97
      %s100 = sadd.s32 %s99, 1
      %p103 = scmp.eq.s32.totalorder %s23, 1
      %p104 = scmp.ne.s32.totalorder %s99, %s101
      %p105 = scmp.eq.s32.totalorder %s23, 0
      %p106 = por %p104, %p105
      %p107 = scmp.ne.s32.totalorder %s99, %s101
      %p108 = scmp.eq.s32.totalorder %s28, 1
      %p109 = por %p107, %p108
      %p110 = scmp.ne.s32.totalorder %s101, %s102
      %p111 = scmp.eq.s32.totalorder %s28, 0
      %p112 = por %p110, %p111
      %p113 = scmp.ne.s32.totalorder %s101, %s102
      %p114 = scmp.eq.s32.totalorder %s29, 1
      %p115 = por %p113, %p114
      %p117 = scmp.ne.s32.totalorder %s102, %s116
      %p118 = scmp.eq.s32.totalorder %s29, 0
      %p119 = por %p117, %p118
      %s121 = sadd.s32 %s120, 1
      %p124 = scmp.eq.s32.totalorder %s23, 1
      %p125 = scmp.ne.s32.totalorder %s120, %s122
      %p126 = scmp.eq.s32.totalorder %s23, 0
      %p127 = por %p125, %p126
      %p128 = scmp.ne.s32.totalorder %s120, %s122
      %p129 = scmp.eq.s32.totalorder %s28, 1
      %p130 = por %p128, %p129
      %p131 = scmp.ne.s32.totalorder %s122, %s123
      %p132 = scmp.eq.s32.totalorder %s28, 0
      %p133 = por %p131, %p132
      %p134 = scmp.ne.s32.totalorder %s122, %s123
      %p135 = scmp.eq.s32.totalorder %s29, 1
      %p136 = por %p134, %p135
      %p138 = scmp.ne.s32.totalorder %s123, %s137
      %p139 = scmp.eq.s32.totalorder %s29, 0
      %p140 = por %p138, %p139
      %s142 = sadd.s32 %s141, 1
      %p145 = scmp.eq.s32.totalorder %s23, 1
      %p146 = scmp.ne.s32.totalorder %s141, %s143
      %p147 = scmp.eq.s32.totalorder %s23, 0
      %p148 = por %p146, %p147
      %p149 = scmp.ne.s32.totalorder %s141, %s143
      %p150 = scmp.eq.s32.totalorder %s28, 1
      %p151 = por %p149, %p150
      %p152 = scmp.ne.s32.totalorder %s143, %s144
      %p153 = scmp.eq.s32.totalorder %s28, 0
      %p154 = por %p152, %p153
      %p155 = scmp.ne.s32.totalorder %s143, %s144
      %p156 = scmp.eq.s32.totalorder %s29, 1
      %p157 = por %p155, %p156
      %p159 = scmp.ne.s32.totalorder %s144, %s158
      %p160 = scmp.eq.s32.totalorder %s29, 0
      %p161 = por %p159, %p160
      %s163 = sadd.s32 %s162, 1
      %p166 = scmp.eq.s32.totalorder %s23, 1
      %p167 = scmp.ne.s32.totalorder %s162, %s164
      %p168 = scmp.eq.s32.totalorder %s23, 0
      %p169 = por %p167, %p168
      %p170 = scmp.ne.s32.totalorder %s162, %s164
      %p171 = scmp.eq.s32.totalorder %s28, 1
      %p172 = por %p170, %p171
      %p173 = scmp.ne.s32.totalorder %s164, %s165
      %p174 = scmp.eq.s32.totalorder %s28, 0
      %p175 = por %p173, %p174
      %p176 = scmp.ne.s32.totalorder %s164, %s165
      %p177 = scmp.eq.s32.totalorder %s29, 1
      %p178 = por %p176, %p177
      %p180 = scmp.ne.s32.totalorder %s165, %s179
      %p181 = scmp.eq.s32.totalorder %s29, 0
      %p182 = por %p180, %p181
      %s184 = sadd.s32 %s183, 1
      %p187 = scmp.eq.s32.totalorder %s23, 1
      %p188 = scmp.ne.s32.totalorder %s183, %s185
      %p189 = scmp.eq.s32.totalorder %s23, 0
      %p190 = por %p188, %p189
      %p191 = scmp.ne.s32.totalorder %s183, %s185
      %p192 = scmp.eq.s32.totalorder %s28, 1
      %p193 = por %p191, %p192
      %p194 = scmp.ne.s32.totalorder %s185, %s186
      %p195 = scmp.eq.s32.totalorder %s28, 0
      %p196 = por %p194, %p195
      %p197 = scmp.ne.s32.totalorder %s185, %s186
      %p198 = scmp.eq.s32.totalorder %s29, 1
      %p199 = por %p197, %p198
      %p201 = scmp.ne.s32.totalorder %s186, %s200
      %p202 = scmp.eq.s32.totalorder %s29, 0
      %p203 = por %p201, %p202
      %s205 = sadd.s32 %s204, 1
      %p208 = scmp.eq.s32.totalorder %s23, 1
      %p209 = scmp.ne.s32.totalorder %s204, %s206
      %p210 = scmp.eq.s32.totalorder %s23, 0
      %p211 = por %p209, %p210
      %p212 = scmp.ne.s32.totalorder %s204, %s206
      %p213 = scmp.eq.s32.totalorder %s28, 1
      %p214 = por %p212, %p213
      %p215 = scmp.ne.s32.totalorder %s206, %s207
      %p216 = scmp.eq.s32.totalorder %s28, 0
      %p217 = por %p215, %p216
      %p218 = scmp.ne.s32.totalorder %s206, %s207
      %p219 = scmp.eq.s32.totalorder %s29, 1
      %p220 = por %p218, %p219
      %p222 = scmp.ne.s32.totalorder %s207, %s221
      %p223 = scmp.eq.s32.totalorder %s29, 0
      %p224 = por %p222, %p223
      %s226 = sadd.s32 %s225, 1
      %p229 = scmp.eq.s32.totalorder %s23, 1
      %p230 = scmp.ne.s32.totalorder %s225, %s227
      %p231 = scmp.eq.s32.totalorder %s23, 0
      %p232 = por %p230, %p231
      %p233 = scmp.ne.s32.totalorder %s225, %s227
      %p234 = scmp.eq.s32.totalorder %s28, 1
      %p235 = por %p233, %p234
      %p236 = scmp.ne.s32.totalorder %s227, %s228
      %p237 = scmp.eq.s32.totalorder %s28, 0
      %p238 = por %p236, %p237
      %p239 = scmp.ne.s32.totalorder %s227, %s228
      %p240 = scmp.eq.s32.totalorder %s29, 1
      %p241 = por %p239, %p240
      %p243 = scmp.ne.s32.totalorder %s228, %s242
      %p244 = scmp.eq.s32.totalorder %s29, 0
      %p245 = por %p243, %p244
      %s247 = sadd.s32 %s246, 1
      %p250 = scmp.eq.s32.totalorder %s23, 1
      %p251 = scmp.ne.s32.totalorder %s246, %s248
      %p252 = scmp.eq.s32.totalorder %s23, 0
      %p253 = por %p251, %p252
      %p254 = scmp.ne.s32.totalorder %s246, %s248
      %p255 = scmp.eq.s32.totalorder %s28, 1
      %p256 = por %p254, %p255
      %p257 = scmp.ne.s32.totalorder %s248, %s249
      %p258 = scmp.eq.s32.totalorder %s28, 0
      %p259 = por %p257, %p258
      %p260 = scmp.ne.s32.totalorder %s248, %s249
      %p261 = scmp.eq.s32.totalorder %s29, 1
      %p262 = por %p260, %p261
      %p264 = scmp.ne.s32.totalorder %s249, %s263
      %p265 = scmp.eq.s32.totalorder %s29, 0
      %p266 = por %p264, %p265
      %s267 = ssub.s32 %s23, %s30
      %p268 = scmp.eq.s32.totalorder %s267, 0
      %s270 = sadd.s32 %s269, 1
      %s271 = scalar_select %p268, %s269, %s270
      %p274 = pneg %p268
      %p275 = scmp.eq.s32.totalorder %s23, 1
      %p276 = por %p274, %p275
      %p277 = scmp.ne.s32.totalorder %s269, %s272
      %p278 = scmp.eq.s32.totalorder %s23, 0
      %p279 = por %p277, %p278
      %p280 = scmp.ne.s32.totalorder %s269, %s272
      %p281 = scmp.eq.s32.totalorder %s28, 1
      %p282 = por %p280, %p281
      %p283 = scmp.ne.s32.totalorder %s272, %s273
      %p284 = scmp.eq.s32.totalorder %s28, 0
      %p285 = por %p283, %p284
      %p286 = scmp.ne.s32.totalorder %s272, %s273
      %p287 = scmp.eq.s32.totalorder %s29, 1
      %p288 = por %p286, %p287
      %p290 = scmp.ne.s32.totalorder %s273, %s289
      %p291 = scmp.eq.s32.totalorder %s29, 0
      %p292 = por %p290, %p291
      %p293 = scmp.le.s32.totalorder 1, %s23
      %p294 = scmp.lt.s32.totalorder %s23, 3
      %p295 = pnand %p293, %p294
      %p296 = pneg %p295
      // Predicated region
      $region9: #{tpu_custom_call.1} parent=5 // pred_check
        _
      $region10: #{tpu_custom_call.1} parent=5 // pred_check_branch
        %298 = sbr.rel (%p295) target = $region12
      $region11: #{tpu_custom_call.1} parent=5 // pred_region
        %s299 = ssub.s32 %s23, 1
        // Predicated region
        $region13: #{tpu_custom_call.1} parent=11 // pred_check
          %p300 = pneg %p70
        $region14: #{tpu_custom_call.1} parent=11 // pred_check_branch
          %302 = sbr.rel (%p300) target = $region16
        $region15: #{tpu_custom_call.1} parent=11 // pred_region
          _
        $region16: #{tpu_custom_call.1} parent=11 // pred_fallthru
          _
        // Predicated region
        $region17: #{tpu_custom_call.1} parent=11 // pred_check
          %p303 = pneg %p91
        $region18: #{tpu_custom_call.1} parent=11 // pred_check_branch
          %305 = sbr.rel (%p303) target = $region20
        $region19: #{tpu_custom_call.1} parent=11 // pred_region
          _
        $region20: #{tpu_custom_call.1} parent=11 // pred_fallthru
          _
        // Predicated region
        $region21: #{tpu_custom_call.1} parent=11 // pred_check
          %p306 = pneg %p112
        $region22: #{tpu_custom_call.1} parent=11 // pred_check_branch
          %308 = sbr.rel (%p306) target = $region24
        $region23: #{tpu_custom_call.1} parent=11 // pred_region
          _
        $region24: #{tpu_custom_call.1} parent=11 // pred_fallthru
          _
        // Predicated region
        $region25: #{tpu_custom_call.1} parent=11 // pred_check
          %p309 = pneg %p133
        $region26: #{tpu_custom_call.1} parent=11 // pred_check_branch
          %311 = sbr.rel (%p309) target = $region28
        $region27: #{tpu_custom_call.1} parent=11 // pred_region
          _
        $region28: #{tpu_custom_call.1} parent=11 // pred_fallthru
          _
        // Predicated region
        $region29: #{tpu_custom_call.1} parent=11 // pred_check
          %p312 = pneg %p154
        $region30: #{tpu_custom_call.1} parent=11 // pred_check_branch
          %314 = sbr.rel (%p312) target = $region32
        $region31: #{tpu_custom_call.1} parent=11 // pred_region
          _
        $region32: #{tpu_custom_call.1} parent=11 // pred_fallthru
          _
        // Predicated region
        $region33: #{tpu_custom_call.1} parent=11 // pred_check
          %p315 = pneg %p175
        $region34: #{tpu_custom_call.1} parent=11 // pred_check_branch
          %317 = sbr.rel (%p315) target = $region36
        $region35: #{tpu_custom_call.1} parent=11 // pred_region
          _
        $region36: #{tpu_custom_call.1} parent=11 // pred_fallthru
          _
        // Predicated region
        $region37: #{tpu_custom_call.1} parent=11 // pred_check
          %p318 = pneg %p196
        $region38: #{tpu_custom_call.1} parent=11 // pred_check_branch
          %320 = sbr.rel (%p318) target = $region40
        $region39: #{tpu_custom_call.1} parent=11 // pred_region
          _
        $region40: #{tpu_custom_call.1} parent=11 // pred_fallthru
          _
        // Predicated region
        $region41: #{tpu_custom_call.1} parent=11 // pred_check
          %p321 = pneg %p217
        $region42: #{tpu_custom_call.1} parent=11 // pred_check_branch
          %323 = sbr.rel (%p321) target = $region44
        $region43: #{tpu_custom_call.1} parent=11 // pred_region
          _
        $region44: #{tpu_custom_call.1} parent=11 // pred_fallthru
          _
        // Predicated region
        $region45: #{tpu_custom_call.1} parent=11 // pred_check
          %p324 = pneg %p238
        $region46: #{tpu_custom_call.1} parent=11 // pred_check_branch
          %326 = sbr.rel (%p324) target = $region48
        $region47: #{tpu_custom_call.1} parent=11 // pred_region
          _
        $region48: #{tpu_custom_call.1} parent=11 // pred_fallthru
          _
        // Predicated region
        $region49: #{tpu_custom_call.1} parent=11 // pred_check
          %p327 = pneg %p259
        $region50: #{tpu_custom_call.1} parent=11 // pred_check_branch
          %329 = sbr.rel (%p327) target = $region52
        $region51: #{tpu_custom_call.1} parent=11 // pred_region
          _
        $region52: #{tpu_custom_call.1} parent=11 // pred_fallthru
          _
      $region12: #{tpu_custom_call.1} parent=5 // pred_fallthru
        _
      %p330 = scmp.lt.s32.totalorder %s23, 2
      // Predicated region
      $region53: #{tpu_custom_call.1} parent=5 // pred_check
        %p331 = pneg %p330
      $region54: #{tpu_custom_call.1} parent=5 // pred_check_branch
        %333 = sbr.rel (%p331) target = $region56
      $region55: #{tpu_custom_call.1} parent=5 // pred_region
        // Predicated region
        $region57: #{tpu_custom_call.1} parent=55 // pred_check
          %p334 = pneg %p43
        $region58: #{tpu_custom_call.1} parent=55 // pred_check_branch
          %336 = sbr.rel (%p334) target = $region60
        $region59: #{tpu_custom_call.1} parent=55 // pred_region
          %s337 = sand.u32 %s33, 1
          %s338 = scalar_lea.sflag [#allocation3], %s337
          %s339 = sand.u32 %s33, 1
          %s340 = smul.addr %s339, 256
          %s341 = scalar_lea.vmem [#allocation2], %s340
          %343 = vsyncadd %s338, 0
          %s344 = smul.addr %s23, 32
          %s345 = smul.addr %s344, 8
          %s346 = scalar_lea.hbm %s0, %s345
          %s347 = sshll.u32 %s346, 4
          %s348 = int_to_ptr.hbm [resolvable:$true] %s347
          %s349 = sshll.u32 %s341, 4
          %s350 = int_to_ptr.vmem [resolvable:$true] %s349
          %355 = dma.hbm_to_vmem [thread:$0]  %s348, 4096, %s350, %s338, 128, 128, 8
        $region60: #{tpu_custom_call.1} parent=55 // pred_fallthru
          _
      $region56: #{tpu_custom_call.1} parent=5 // pred_fallthru
        _
      %p356 = scmp.le.s32.totalorder 1, %s23
      %p357 = scmp.lt.s32.totalorder %s23, 3
      %p358 = pnand %p356, %p357
      %p359 = pneg %p358
      // Predicated region
      $region61: #{tpu_custom_call.1} parent=5 // pred_check
        _
      $region62: #{tpu_custom_call.1} parent=5 // pred_check_branch
        %361 = sbr.rel (%p358) target = $region64
      $region63: #{tpu_custom_call.1} parent=5 // pred_region
        %s362 = ssub.s32 %s23, 1
        %s363 = sand.u32 %s36, 1
        %s364 = scalar_lea.sflag [#allocation3], %s363
        %s365 = sand.u32 %s36, 1
        %s366 = smul.addr %s365, 256
        %s367 = scalar_lea.vmem [#allocation2], %s366
        // Predicated region
        $region65: #{tpu_custom_call.1} parent=63 // pred_check
          %p368 = pneg %p49
        $region66: #{tpu_custom_call.1} parent=63 // pred_check_branch
          %370 = sbr.rel (%p368) target = $region68
        $region67: #{tpu_custom_call.1} parent=63 // pred_region
          %372 = dma.done %s364, 4096
        $region68: #{tpu_custom_call.1} parent=63 // pred_fallthru
          _
        %s373 = sand.u32 %s36, 1
        %s374 = scalar_lea.sflag [#allocation3], %s373
        %s375 = sand.u32 %s36, 1
        %s376 = smul.addr %s375, 256
        %s377 = scalar_lea.vmem [#allocation2], %s376
        %p378 = pneg %p49
        %p379 = pneg %p46
        %p380 = pneg %p70
        %p381 = pneg %p67
        %p382 = pneg %p91
        %p383 = pneg %p88
        %p384 = pneg %p112
        %p385 = pneg %p109
        %p386 = pneg %p133
        %p387 = pneg %p130
        %p388 = pneg %p154
        %p389 = pneg %p151
        %p390 = pneg %p175
        %p391 = pneg %p172
        %p392 = pneg %p196
        %p393 = pneg %p193
        %p394 = pneg %p217
        %p395 = pneg %p214
        %p396 = pneg %p238
        %p397 = pneg %p235
        %p398 = pneg %p259
        %p399 = pneg %p256
        %p400 = pneg %p285
        %p401 = pneg %p282
        %s402 = sand.u32 %s272, 1
        %s403 = scalar_lea.sflag [#allocation4], %s402
        %s404 = sand.u32 %s272, 1
        %s405 = smul.addr %s404, 256
        %s406 = scalar_lea.vmem [#allocation5], %s405
        %v408 = vld [vmem:[%s367] sm:$0xff]
        %v409 = vld [vmem:[%s367 + $0x8] sm:$0xff]
        %v410 = vld [vmem:[%s367 + $0x10] sm:$0xff]
        %v411 = vld [vmem:[%s367 + $0x18] sm:$0xff]
        %v412 = vld [vmem:[%s367 + $0x20] sm:$0xff]
        %v413 = vld [vmem:[%s367 + $0x28] sm:$0xff]
        %v414 = vld [vmem:[%s367 + $0x30] sm:$0xff]
        %v415 = vld [vmem:[%s367 + $0x38] sm:$0xff]
        %v416 = vld [vmem:[%s367 + $0x40] sm:$0xff]
        %v417 = vld [vmem:[%s367 + $0x48] sm:$0xff]
        %v418 = vld [vmem:[%s367 + $0x50] sm:$0xff]
        %v419 = vld [vmem:[%s367 + $0x58] sm:$0xff]
        %v420 = vld [vmem:[%s367 + $0x60] sm:$0xff]
        %v421 = vld [vmem:[%s367 + $0x68] sm:$0xff]
        %v422 = vld [vmem:[%s367 + $0x70] sm:$0xff]
        %v423 = vld [vmem:[%s367 + $0x78] sm:$0xff]
        %v424 = vld [vmem:[%s367 + $0x80] sm:$0xff]
        %v425 = vld [vmem:[%s367 + $0x88] sm:$0xff]
        %v426 = vld [vmem:[%s367 + $0x90] sm:$0xff]
        %v427 = vld [vmem:[%s367 + $0x98] sm:$0xff]
        %v428 = vld [vmem:[%s367 + $0xa0] sm:$0xff]
        %v429 = vld [vmem:[%s367 + $0xa8] sm:$0xff]
        %v430 = vld [vmem:[%s367 + $0xb0] sm:$0xff]
        %v431 = vld [vmem:[%s367 + $0xb8] sm:$0xff]
        %v432 = vld [vmem:[%s367 + $0xc0] sm:$0xff]
        %v433 = vld [vmem:[%s367 + $0xc8] sm:$0xff]
        %v434 = vld [vmem:[%s367 + $0xd0] sm:$0xff]
        %v435 = vld [vmem:[%s367 + $0xd8] sm:$0xff]
        %v436 = vld [vmem:[%s367 + $0xe0] sm:$0xff]
        %v437 = vld [vmem:[%s367 + $0xe8] sm:$0xff]
        %v438 = vld [vmem:[%s367 + $0xf0] sm:$0xff]
        %v439 = vld [vmem:[%s367 + $0xf8] sm:$0xff]
        %v440 = vpack.c.bf16 %v409, %v408
        %v441 = vpack.c.bf16 %v411, %v410
        %v442 = vpack.c.bf16 %v413, %v412
        %v443 = vpack.c.bf16 %v415, %v414
        %v444 = vpack.c.bf16 %v417, %v416
        %v445 = vpack.c.bf16 %v419, %v418
        %v446 = vpack.c.bf16 %v421, %v420
        %v447 = vpack.c.bf16 %v423, %v422
        %v448 = vpack.c.bf16 %v425, %v424
        %v449 = vpack.c.bf16 %v427, %v426
        %v450 = vpack.c.bf16 %v429, %v428
        %v451 = vpack.c.bf16 %v431, %v430
        %v452 = vpack.c.bf16 %v433, %v432
        %v453 = vpack.c.bf16 %v435, %v434
        %v454 = vpack.c.bf16 %v437, %v436
        %v455 = vpack.c.bf16 %v439, %v438
        %v456 = vld [vmem:[%s1] sm:$0xf]
        %v457 = vld [vmem:[%s1 + $0x4] sm:$0xf]
        %v458 = vld [vmem:[%s1 + $0x8] sm:$0xf]
        %v459 = vld [vmem:[%s1 + $0xc] sm:$0xf]
        %v460 = vld [vmem:[%s1 + $0x10] sm:$0xf]
        %v461 = vld [vmem:[%s1 + $0x14] sm:$0xf]
        %v462 = vld [vmem:[%s1 + $0x18] sm:$0xf]
        %v463 = vld [vmem:[%s1 + $0x1c] sm:$0xf]
        %v464 = vld [vmem:[%s1 + $0x20] sm:$0xf]
        %v465 = vld [vmem:[%s1 + $0x24] sm:$0xf]
        %v466 = vld [vmem:[%s1 + $0x28] sm:$0xf]
        %v467 = vld [vmem:[%s1 + $0x2c] sm:$0xf]
        %v468 = vld [vmem:[%s1 + $0x30] sm:$0xf]
        %v469 = vld [vmem:[%s1 + $0x34] sm:$0xf]
        %v470 = vld [vmem:[%s1 + $0x38] sm:$0xf]
        %v471 = vld [vmem:[%s1 + $0x3c] sm:$0xf]
        %v472 = vld [vmem:[%s2] sm:$0x1]
        %v474 = vperm.slane %v472, 0
        %v492 = vunpack.c.l.b16 %v456
        %v493 = vunpack.c.l.b16 %v457
        %v494 = vunpack.c.l.b16 %v458
        %v495 = vunpack.c.l.b16 %v459
        %v496 = vunpack.c.l.b16 %v460
        %v497 = vunpack.c.l.b16 %v461
        %v498 = vunpack.c.l.b16 %v462
        %v499 = vunpack.c.l.b16 %v463
        %v500 = vunpack.c.l.b16 %v464
        %v501 = vunpack.c.l.b16 %v465
        %v502 = vunpack.c.l.b16 %v466
        %v503 = vunpack.c.l.b16 %v467
        %v504 = vunpack.c.l.b16 %v468
        %v505 = vunpack.c.l.b16 %v469
        %v506 = vunpack.c.l.b16 %v470
        %v507 = vunpack.c.l.b16 %v471
        %v508 = vpack.c.b16 %v493, %v492
        %v509 = vpack.c.b16 %v495, %v494
        %v510 = vpack.c.b16 %v497, %v496
        %v511 = vpack.c.b16 %v499, %v498
        %v512 = vpack.c.b16 %v501, %v500
        %v513 = vpack.c.b16 %v503, %v502
        %v514 = vpack.c.b16 %v505, %v504
        %v515 = vpack.c.b16 %v507, %v506
        %524 = vmatpush.bf16.msra.mxu0 %v515
        %525 = vmatpush.bf16.msra.mxu0 %v514
        %526 = vmatpush.bf16.msra.mxu0 %v513
        %527 = vmatpush.bf16.msra.mxu0 %v512
        %528 = vmatpush.bf16.msra.mxu0 %v511
        %529 = vmatpush.bf16.msra.mxu0 %v510
        %530 = vmatpush.bf16.msra.mxu0 %v509
        %531 = vmatpush.bf16.msra.mxu0 %v508
        %532 = vmatmul.bf16.gmra.mxu0 %v440
        %v533 = vpop.f32.mrf.mxu0
        %v534 = vadd.f32 %v474, %v533
        %v535 = vpop.f32.mrf.mxu0
        %v536 = vadd.f32 %v474, %v535
        %537 = vmatmul.bf16.gmra.mxu0 %v441
        %v538 = vpop.f32.mrf.mxu0
        %v539 = vadd.f32 %v474, %v538
        %v540 = vpop.f32.mrf.mxu0
        %v541 = vadd.f32 %v474, %v540
        %542 = vmatmul.bf16.gmra.mxu0 %v442
        %v543 = vpop.f32.mrf.mxu0
        %v544 = vadd.f32 %v474, %v543
        %v545 = vpop.f32.mrf.mxu0
        %v546 = vadd.f32 %v474, %v545
        %547 = vmatmul.bf16.gmra.mxu0 %v443
        %v548 = vpop.f32.mrf.mxu0
        %v549 = vadd.f32 %v474, %v548
        %v550 = vpop.f32.mrf.mxu0
        %v551 = vadd.f32 %v474, %v550
        %552 = vmatmul.bf16.gmra.mxu0 %v444
        %v553 = vpop.f32.mrf.mxu0
        %v554 = vadd.f32 %v474, %v553
        %v555 = vpop.f32.mrf.mxu0
        %v556 = vadd.f32 %v474, %v555
        %557 = vmatmul.bf16.gmra.mxu0 %v445
        %v558 = vpop.f32.mrf.mxu0
        %v559 = vadd.f32 %v474, %v558
        %v560 = vpop.f32.mrf.mxu0
        %v561 = vadd.f32 %v474, %v560
        %562 = vmatmul.bf16.gmra.mxu0 %v446
        %v563 = vpop.f32.mrf.mxu0
        %v564 = vadd.f32 %v474, %v563
        %v565 = vpop.f32.mrf.mxu0
        %v566 = vadd.f32 %v474, %v565
        %567 = vmatmul.bf16.gmra.mxu0 %v447
        %v568 = vpop.f32.mrf.mxu0
        %v569 = vadd.f32 %v474, %v568
        %v570 = vpop.f32.mrf.mxu0
        %v571 = vadd.f32 %v474, %v570
        %572 = vmatmul.bf16.gmra.mxu0 %v448
        %v573 = vpop.f32.mrf.mxu0
        %v574 = vadd.f32 %v474, %v573
        %v575 = vpop.f32.mrf.mxu0
        %v576 = vadd.f32 %v474, %v575
        %577 = vmatmul.bf16.gmra.mxu0 %v449
        %v578 = vpop.f32.mrf.mxu0
        %v579 = vadd.f32 %v474, %v578
        %v580 = vpop.f32.mrf.mxu0
        %v581 = vadd.f32 %v474, %v580
        %582 = vmatmul.bf16.gmra.mxu0 %v450
        %v583 = vpop.f32.mrf.mxu0
        %v584 = vadd.f32 %v474, %v583
        %v585 = vpop.f32.mrf.mxu0
        %v586 = vadd.f32 %v474, %v585
        %587 = vmatmul.bf16.gmra.mxu0 %v451
        %v588 = vpop.f32.mrf.mxu0
        %v589 = vadd.f32 %v474, %v588
        %v590 = vpop.f32.mrf.mxu0
        %v591 = vadd.f32 %v474, %v590
        %592 = vmatmul.bf16.gmra.mxu0 %v452
        %v593 = vpop.f32.mrf.mxu0
        %v594 = vadd.f32 %v474, %v593
        %v595 = vpop.f32.mrf.mxu0
        %v596 = vadd.f32 %v474, %v595
        %597 = vmatmul.bf16.gmra.mxu0 %v453
        %v598 = vpop.f32.mrf.mxu0
        %v599 = vadd.f32 %v474, %v598
        %v600 = vpop.f32.mrf.mxu0
        %v601 = vadd.f32 %v474, %v600
        %602 = vmatmul.bf16.gmra.mxu0 %v454
        %v603 = vpop.f32.mrf.mxu0
        %v604 = vadd.f32 %v474, %v603
        %v605 = vpop.f32.mrf.mxu0
        %v606 = vadd.f32 %v474, %v605
        %607 = vmatmul.bf16.gmra.mxu0 %v455
        %v608 = vpop.f32.mrf.mxu0
        %v609 = vadd.f32 %v474, %v608
        %v610 = vpop.f32.mrf.mxu0
        %v611 = vadd.f32 %v474, %v610
        %612 = vdwg.mxu0
        %vm613 = vcmp.gt.f32.partialorder %v534, 0.0
        %vm614 = vcmp.gt.f32.partialorder %v536, 0.0
        %vm615 = vcmp.gt.f32.partialorder %v539, 0.0
        %vm616 = vcmp.gt.f32.partialorder %v541, 0.0
        %vm617 = vcmp.gt.f32.partialorder %v544, 0.0
        %vm618 = vcmp.gt.f32.partialorder %v546, 0.0
        %vm619 = vcmp.gt.f32.partialorder %v549, 0.0
        %vm620 = vcmp.gt.f32.partialorder %v551, 0.0
        %vm621 = vcmp.gt.f32.partialorder %v554, 0.0
        %vm622 = vcmp.gt.f32.partialorder %v556, 0.0
        %vm623 = vcmp.gt.f32.partialorder %v559, 0.0
        %vm624 = vcmp.gt.f32.partialorder %v561, 0.0
        %vm625 = vcmp.gt.f32.partialorder %v564, 0.0
        %vm626 = vcmp.gt.f32.partialorder %v566, 0.0
        %vm627 = vcmp.gt.f32.partialorder %v569, 0.0
        %vm628 = vcmp.gt.f32.partialorder %v571, 0.0
        %vm629 = vcmp.gt.f32.partialorder %v574, 0.0
        %vm630 = vcmp.gt.f32.partialorder %v576, 0.0
        %vm631 = vcmp.gt.f32.partialorder %v579, 0.0
        %vm632 = vcmp.gt.f32.partialorder %v581, 0.0
        %vm633 = vcmp.gt.f32.partialorder %v584, 0.0
        %vm634 = vcmp.gt.f32.partialorder %v586, 0.0
        %vm635 = vcmp.gt.f32.partialorder %v589, 0.0
        %vm636 = vcmp.gt.f32.partialorder %v591, 0.0
        %vm637 = vcmp.gt.f32.partialorder %v594, 0.0
        %vm638 = vcmp.gt.f32.partialorder %v596, 0.0
        %vm639 = vcmp.gt.f32.partialorder %v599, 0.0
        %vm640 = vcmp.gt.f32.partialorder %v601, 0.0
        %vm641 = vcmp.gt.f32.partialorder %v604, 0.0
        %vm642 = vcmp.gt.f32.partialorder %v606, 0.0
        %vm643 = vcmp.gt.f32.partialorder %v609, 0.0
        %vm644 = vcmp.gt.f32.partialorder %v611, 0.0
        %v645 = vmul.f32 %v534, 0.001
        %v646 = vmul.f32 %v536, 0.001
        %v647 = vmul.f32 %v539, 0.001
        %v648 = vmul.f32 %v541, 0.001
        %v649 = vmul.f32 %v544, 0.001
        %v650 = vmul.f32 %v546, 0.001
        %v651 = vmul.f32 %v549, 0.001
        %v652 = vmul.f32 %v551, 0.001
        %v653 = vmul.f32 %v554, 0.001
        %v654 = vmul.f32 %v556, 0.001
        %v655 = vmul.f32 %v559, 0.001
        %v656 = vmul.f32 %v561, 0.001
        %v657 = vmul.f32 %v564, 0.001
        %v658 = vmul.f32 %v566, 0.001
        %v659 = vmul.f32 %v569, 0.001
        %v660 = vmul.f32 %v571, 0.001
        %v661 = vmul.f32 %v574, 0.001
        %v662 = vmul.f32 %v576, 0.001
        %v663 = vmul.f32 %v579, 0.001
        %v664 = vmul.f32 %v581, 0.001
        %v665 = vmul.f32 %v584, 0.001
        %v666 = vmul.f32 %v586, 0.001
        %v667 = vmul.f32 %v589, 0.001
        %v668 = vmul.f32 %v591, 0.001
        %v669 = vmul.f32 %v594, 0.001
        %v670 = vmul.f32 %v596, 0.001
        %v671 = vmul.f32 %v599, 0.001
        %v672 = vmul.f32 %v601, 0.001
        %v673 = vmul.f32 %v604, 0.001
        %v674 = vmul.f32 %v606, 0.001
        %v675 = vmul.f32 %v609, 0.001
        %v676 = vmul.f32 %v611, 0.001
        %v677 = vsel %vm613, %v534, %v645
        %v678 = vsel %vm614, %v536, %v646
        %v679 = vsel %vm615, %v539, %v647
        %v680 = vsel %vm616, %v541, %v648
        %v681 = vsel %vm617, %v544, %v649
        %v682 = vsel %vm618, %v546, %v650
        %v683 = vsel %vm619, %v549, %v651
        %v684 = vsel %vm620, %v551, %v652
        %v685 = vsel %vm621, %v554, %v653
        %v686 = vsel %vm622, %v556, %v654
        %v687 = vsel %vm623, %v559, %v655
        %v688 = vsel %vm624, %v561, %v656
        %v689 = vsel %vm625, %v564, %v657
        %v690 = vsel %vm626, %v566, %v658
        %v691 = vsel %vm627, %v569, %v659
        %v692 = vsel %vm628, %v571, %v660
        %v693 = vsel %vm629, %v574, %v661
        %v694 = vsel %vm630, %v576, %v662
        %v695 = vsel %vm631, %v579, %v663
        %v696 = vsel %vm632, %v581, %v664
        %v697 = vsel %vm633, %v584, %v665
        %v698 = vsel %vm634, %v586, %v666
        %v699 = vsel %vm635, %v589, %v667
        %v700 = vsel %vm636, %v591, %v668
        %v701 = vsel %vm637, %v594, %v669
        %v702 = vsel %vm638, %v596, %v670
        %v703 = vsel %vm639, %v599, %v671
        %v704 = vsel %vm640, %v601, %v672
        %v705 = vsel %vm641, %v604, %v673
        %v706 = vsel %vm642, %v606, %v674
        %v707 = vsel %vm643, %v609, %v675
        %v708 = vsel %vm644, %v611, %v676
        %vm742 = vcmask 1040384
        %v743 = vrot.slane 0.0, 7
        %v744 = vsel %vm742, %v743, %v743
        %v745 = vrot.slane %v677, 7
        %v746 = vrot.slane %v678, 7
        %v747 = vsel %vm742, %v745, %v746
        %v748 = vrot.slane %v679, 7
        %v749 = vrot.slane %v680, 7
        %v750 = vsel %vm742, %v748, %v749
        %v751 = vrot.slane %v681, 7
        %v752 = vrot.slane %v682, 7
        %v753 = vsel %vm742, %v751, %v752
        %v754 = vrot.slane %v683, 7
        %v755 = vrot.slane %v684, 7
        %v756 = vsel %vm742, %v754, %v755
        %v757 = vrot.slane %v685, 7
        %v758 = vrot.slane %v686, 7
        %v759 = vsel %vm742, %v757, %v758
        %v760 = vrot.slane %v687, 7
        %v761 = vrot.slane %v688, 7
        %v762 = vsel %vm742, %v760, %v761
        %v763 = vrot.slane %v689, 7
        %v764 = vrot.slane %v690, 7
        %v765 = vsel %vm742, %v763, %v764
        %v766 = vrot.slane %v691, 7
        %v767 = vrot.slane %v692, 7
        %v768 = vsel %vm742, %v766, %v767
        %v769 = vrot.slane %v693, 7
        %v770 = vrot.slane %v694, 7
        %v771 = vsel %vm742, %v769, %v770
        %v772 = vrot.slane %v695, 7
        %v773 = vrot.slane %v696, 7
        %v774 = vsel %vm742, %v772, %v773
        %v775 = vrot.slane %v697, 7
        %v776 = vrot.slane %v698, 7
        %v777 = vsel %vm742, %v775, %v776
        %v778 = vrot.slane %v699, 7
        %v779 = vrot.slane %v700, 7
        %v780 = vsel %vm742, %v778, %v779
        %v781 = vrot.slane %v701, 7
        %v782 = vrot.slane %v702, 7
        %v783 = vsel %vm742, %v781, %v782
        %v784 = vrot.slane %v703, 7
        %v785 = vrot.slane %v704, 7
        %v786 = vsel %vm742, %v784, %v785
        %v787 = vrot.slane %v705, 7
        %v788 = vrot.slane %v706, 7
        %v789 = vsel %vm742, %v787, %v788
        %v790 = vrot.slane %v707, 7
        %v791 = vrot.slane %v708, 7
        %v792 = vsel %vm742, %v790, %v791
        %v842 = vsel %vm742, 0.0, %v743
        %v843 = vsel %vm742, 0.0, %v745
        %v844 = vsel %vm742, 0.0, %v748
        %v845 = vsel %vm742, 0.0, %v751
        %v846 = vsel %vm742, 0.0, %v754
        %v847 = vsel %vm742, 0.0, %v757
        %v848 = vsel %vm742, 0.0, %v760
        %v849 = vsel %vm742, 0.0, %v763
        %v850 = vsel %vm742, 0.0, %v766
        %v851 = vsel %vm742, 0.0, %v769
        %v852 = vsel %vm742, 0.0, %v772
        %v853 = vsel %vm742, 0.0, %v775
        %v854 = vsel %vm742, 0.0, %v778
        %v855 = vsel %vm742, 0.0, %v781
        %v856 = vsel %vm742, 0.0, %v784
        %v857 = vsel %vm742, 0.0, %v787
        %v858 = vsel %vm742, 0.0, %v790
        %v859 = vsel %vm742, %v743, 0.0
        %v860 = vsel %vm742, %v746, 0.0
        %v861 = vsel %vm742, %v749, 0.0
        %v862 = vsel %vm742, %v752, 0.0
        %v863 = vsel %vm742, %v755, 0.0
        %v864 = vsel %vm742, %v758, 0.0
        %v865 = vsel %vm742, %v761, 0.0
        %v866 = vsel %vm742, %v764, 0.0
        %v867 = vsel %vm742, %v767, 0.0
        %v868 = vsel %vm742, %v770, 0.0
        %v869 = vsel %vm742, %v773, 0.0
        %v870 = vsel %vm742, %v776, 0.0
        %v871 = vsel %vm742, %v779, 0.0
        %v872 = vsel %vm742, %v782, 0.0
        %v873 = vsel %vm742, %v785, 0.0
        %v874 = vsel %vm742, %v788, 0.0
        %v875 = vsel %vm742, %v791, 0.0
        %v876 = vld [vmem:[%s3] sm:$0xf]
        %v877 = vld [vmem:[%s3 + $0x4] sm:$0xf]
        %v878 = vld [vmem:[%s3 + $0x8] sm:$0xf]
        %v879 = vld [vmem:[%s3 + $0xc] sm:$0xf]
        %v880 = vld [vmem:[%s3 + $0x10] sm:$0xf]
        %v881 = vld [vmem:[%s3 + $0x14] sm:$0xf]
        %v882 = vld [vmem:[%s3 + $0x18] sm:$0xf]
        %v883 = vld [vmem:[%s3 + $0x1c] sm:$0xf]
        %v884 = vld [vmem:[%s3 + $0x20] sm:$0xf]
        %v885 = vld [vmem:[%s3 + $0x24] sm:$0xf]
        %v886 = vld [vmem:[%s3 + $0x28] sm:$0xf]
        %v887 = vld [vmem:[%s3 + $0x2c] sm:$0xf]
        %v888 = vld [vmem:[%s3 + $0x30] sm:$0xf]
        %v889 = vld [vmem:[%s3 + $0x34] sm:$0xf]
        %v890 = vld [vmem:[%s3 + $0x38] sm:$0xf]
        %v891 = vld [vmem:[%s3 + $0x3c] sm:$0xf]
        %v892 = vld [vmem:[%s3 + $0x40] sm:$0xf]
        %v893 = vld [vmem:[%s3 + $0x44] sm:$0xf]
        %v894 = vld [vmem:[%s3 + $0x48] sm:$0xf]
        %v895 = vld [vmem:[%s3 + $0x4c] sm:$0xf]
        %v896 = vld [vmem:[%s3 + $0x50] sm:$0xf]
        %v897 = vld [vmem:[%s3 + $0x54] sm:$0xf]
        %v898 = vld [vmem:[%s3 + $0x58] sm:$0xf]
        %v899 = vld [vmem:[%s3 + $0x5c] sm:$0xf]
        %v900 = vld [vmem:[%s3 + $0x60] sm:$0xf]
        %v901 = vld [vmem:[%s3 + $0x64] sm:$0xf]
        %v902 = vld [vmem:[%s3 + $0x68] sm:$0xf]
        %v903 = vld [vmem:[%s3 + $0x6c] sm:$0xf]
        %v904 = vld [vmem:[%s3 + $0x70] sm:$0xf]
        %v905 = vld [vmem:[%s3 + $0x74] sm:$0xf]
        %v906 = vld [vmem:[%s3 + $0x78] sm:$0xf]
        %v907 = vld [vmem:[%s3 + $0x7c] sm:$0xf]
        %v908 = vld [vmem:[%s3 + $0x80] sm:$0xf]
        %v909 = vld [vmem:[%s3 + $0x84] sm:$0xf]
        %v910 = vld [vmem:[%s3 + $0x88] sm:$0xf]
        %v911 = vld [vmem:[%s3 + $0x8c] sm:$0xf]
        %928 = vrot.lane.b32.xlu0 %v843, 32
        %v929 = vpop.permute.xlu0 %928
        %930 = vrot.lane.b32.xlu0 %v747, 32
        %v931 = vpop.permute.xlu0 %930
        %932 = vrot.lane.b32.xlu0 %v844, 32
        %v933 = vpop.permute.xlu0 %932
        %934 = vrot.lane.b32.xlu0 %v750, 32
        %v935 = vpop.permute.xlu0 %934
        %936 = vrot.lane.b32.xlu0 %v845, 32
        %v937 = vpop.permute.xlu0 %936
        %938 = vrot.lane.b32.xlu0 %v753, 32
        %v939 = vpop.permute.xlu0 %938
        %940 = vrot.lane.b32.xlu0 %v846, 32
        %v941 = vpop.permute.xlu0 %940
        %942 = vrot.lane.b32.xlu0 %v756, 32
        %v943 = vpop.permute.xlu0 %942
        %944 = vrot.lane.b32.xlu0 %v847, 32
        %v945 = vpop.permute.xlu0 %944
        %946 = vrot.lane.b32.xlu0 %v759, 32
        %v947 = vpop.permute.xlu0 %946
        %948 = vrot.lane.b32.xlu0 %v848, 32
        %v949 = vpop.permute.xlu0 %948
        %950 = vrot.lane.b32.xlu0 %v762, 32
        %v951 = vpop.permute.xlu0 %950
        %952 = vrot.lane.b32.xlu0 %v849, 32
        %v953 = vpop.permute.xlu0 %952
        %954 = vrot.lane.b32.xlu0 %v765, 32
        %v955 = vpop.permute.xlu0 %954
        %956 = vrot.lane.b32.xlu0 %v850, 32
        %v957 = vpop.permute.xlu0 %956
        %958 = vrot.lane.b32.xlu0 %v768, 32
        %v959 = vpop.permute.xlu0 %958
        %960 = vrot.lane.b32.xlu0 %v851, 32
        %v961 = vpop.permute.xlu0 %960
        %962 = vrot.lane.b32.xlu0 %v771, 32
        %v963 = vpop.permute.xlu0 %962
        %964 = vrot.lane.b32.xlu0 %v852, 32
        %v965 = vpop.permute.xlu0 %964
        %966 = vrot.lane.b32.xlu0 %v774, 32
        %v967 = vpop.permute.xlu0 %966
        %968 = vrot.lane.b32.xlu0 %v853, 32
        %v969 = vpop.permute.xlu0 %968
        %970 = vrot.lane.b32.xlu0 %v777, 32
        %v971 = vpop.permute.xlu0 %970
        %972 = vrot.lane.b32.xlu0 %v854, 32
        %v973 = vpop.permute.xlu0 %972
        %974 = vrot.lane.b32.xlu0 %v780, 32
        %v975 = vpop.permute.xlu0 %974
        %976 = vrot.lane.b32.xlu0 %v855, 32
        %v977 = vpop.permute.xlu0 %976
        %978 = vrot.lane.b32.xlu0 %v783, 32
        %v979 = vpop.permute.xlu0 %978
        %980 = vrot.lane.b32.xlu0 %v856, 32
        %v981 = vpop.permute.xlu0 %980
        %982 = vrot.lane.b32.xlu0 %v786, 32
        %v983 = vpop.permute.xlu0 %982
        %984 = vrot.lane.b32.xlu0 %v857, 32
        %v985 = vpop.permute.xlu0 %984
        %986 = vrot.lane.b32.xlu0 %v789, 32
        %v987 = vpop.permute.xlu0 %986
        %988 = vrot.lane.b32.xlu0 %v858, 32
        %v989 = vpop.permute.xlu0 %988
        %990 = vrot.lane.b32.xlu0 %v792, 32
        %v991 = vpop.permute.xlu0 %990
        %1025 = vrot.lane.b32.xlu0 %v844, 64
        %v1026 = vpop.permute.xlu0 %1025
        %1027 = vrot.lane.b32.xlu0 %v750, 64
        %v1028 = vpop.permute.xlu0 %1027
        %1029 = vrot.lane.b32.xlu0 %v845, 64
        %v1030 = vpop.permute.xlu0 %1029
        %1031 = vrot.lane.b32.xlu0 %v753, 64
        %v1032 = vpop.permute.xlu0 %1031
        %1033 = vrot.lane.b32.xlu0 %v846, 64
        %v1034 = vpop.permute.xlu0 %1033
        %1035 = vrot.lane.b32.xlu0 %v756, 64
        %v1036 = vpop.permute.xlu0 %1035
        %1037 = vrot.lane.b32.xlu0 %v847, 64
        %v1038 = vpop.permute.xlu0 %1037
        %1039 = vrot.lane.b32.xlu0 %v759, 64
        %v1040 = vpop.permute.xlu0 %1039
        %1041 = vrot.lane.b32.xlu0 %v848, 64
        %v1042 = vpop.permute.xlu0 %1041
        %1043 = vrot.lane.b32.xlu0 %v762, 64
        %v1044 = vpop.permute.xlu0 %1043
        %1045 = vrot.lane.b32.xlu0 %v849, 64
        %v1046 = vpop.permute.xlu0 %1045
        %1047 = vrot.lane.b32.xlu0 %v765, 64
        %v1048 = vpop.permute.xlu0 %1047
        %1049 = vrot.lane.b32.xlu0 %v850, 64
        %v1050 = vpop.permute.xlu0 %1049
        %1051 = vrot.lane.b32.xlu0 %v768, 64
        %v1052 = vpop.permute.xlu0 %1051
        %1053 = vrot.lane.b32.xlu0 %v851, 64
        %v1054 = vpop.permute.xlu0 %1053
        %1055 = vrot.lane.b32.xlu0 %v771, 64
        %v1056 = vpop.permute.xlu0 %1055
        %1057 = vrot.lane.b32.xlu0 %v852, 64
        %v1058 = vpop.permute.xlu0 %1057
        %1059 = vrot.lane.b32.xlu0 %v774, 64
        %v1060 = vpop.permute.xlu0 %1059
        %1061 = vrot.lane.b32.xlu0 %v853, 64
        %v1062 = vpop.permute.xlu0 %1061
        %1063 = vrot.lane.b32.xlu0 %v777, 64
        %v1064 = vpop.permute.xlu0 %1063
        %1065 = vrot.lane.b32.xlu0 %v854, 64
        %v1066 = vpop.permute.xlu0 %1065
        %1067 = vrot.lane.b32.xlu0 %v780, 64
        %v1068 = vpop.permute.xlu0 %1067
        %1069 = vrot.lane.b32.xlu0 %v855, 64
        %v1070 = vpop.permute.xlu0 %1069
        %1071 = vrot.lane.b32.xlu0 %v783, 64
        %v1072 = vpop.permute.xlu0 %1071
        %1073 = vrot.lane.b32.xlu0 %v856, 64
        %v1074 = vpop.permute.xlu0 %1073
        %1075 = vrot.lane.b32.xlu0 %v786, 64
        %v1076 = vpop.permute.xlu0 %1075
        %1077 = vrot.lane.b32.xlu0 %v857, 64
        %v1078 = vpop.permute.xlu0 %1077
        %1079 = vrot.lane.b32.xlu0 %v789, 64
        %v1080 = vpop.permute.xlu0 %1079
        %1081 = vrot.lane.b32.xlu0 %v858, 64
        %v1082 = vpop.permute.xlu0 %1081
        %1083 = vrot.lane.b32.xlu0 %v792, 64
        %v1084 = vpop.permute.xlu0 %1083
        %1085 = vrot.lane.b32.xlu0 %v842, 64
        %v1086 = vpop.permute.xlu0 %1085
        %1087 = vrot.lane.b32.xlu0 %v744, 64
        %v1088 = vpop.permute.xlu0 %1087
        %vm1121 = vcmask 261120
        %v1122 = vsel %vm1121, %v842, %v929
        %v1123 = vsel %vm1121, %v744, %v931
        %v1124 = vsel %vm1121, %v843, %v933
        %v1125 = vsel %vm1121, %v747, %v935
        %v1126 = vsel %vm1121, %v844, %v937
        %v1127 = vsel %vm1121, %v750, %v939
        %v1128 = vsel %vm1121, %v845, %v941
        %v1129 = vsel %vm1121, %v753, %v943
        %v1130 = vsel %vm1121, %v846, %v945
        %v1131 = vsel %vm1121, %v756, %v947
        %v1132 = vsel %vm1121, %v847, %v949
        %v1133 = vsel %vm1121, %v759, %v951
        %v1134 = vsel %vm1121, %v848, %v953
        %v1135 = vsel %vm1121, %v762, %v955
        %v1136 = vsel %vm1121, %v849, %v957
        %v1137 = vsel %vm1121, %v765, %v959
        %v1138 = vsel %vm1121, %v850, %v961
        %v1139 = vsel %vm1121, %v768, %v963
        %v1140 = vsel %vm1121, %v851, %v965
        %v1141 = vsel %vm1121, %v771, %v967
        %v1142 = vsel %vm1121, %v852, %v969
        %v1143 = vsel %vm1121, %v774, %v971
        %v1144 = vsel %vm1121, %v853, %v973
        %v1145 = vsel %vm1121, %v777, %v975
        %v1146 = vsel %vm1121, %v854, %v977
        %v1147 = vsel %vm1121, %v780, %v979
        %v1148 = vsel %vm1121, %v855, %v981
        %v1149 = vsel %vm1121, %v783, %v983
        %v1150 = vsel %vm1121, %v856, %v985
        %v1151 = vsel %vm1121, %v786, %v987
        %v1152 = vsel %vm1121, %v857, %v989
        %v1153 = vsel %vm1121, %v789, %v991
        %vm1154 = vcmask 523264
        %v1155 = vsel %vm1154, %v1122, %v1026
        %v1156 = vsel %vm1154, %v1123, %v1028
        %v1157 = vsel %vm1154, %v1124, %v1030
        %v1158 = vsel %vm1154, %v1125, %v1032
        %v1159 = vsel %vm1154, %v1126, %v1034
        %v1160 = vsel %vm1154, %v1127, %v1036
        %v1161 = vsel %vm1154, %v1128, %v1038
        %v1162 = vsel %vm1154, %v1129, %v1040
        %v1163 = vsel %vm1154, %v1130, %v1042
        %v1164 = vsel %vm1154, %v1131, %v1044
        %v1165 = vsel %vm1154, %v1132, %v1046
        %v1166 = vsel %vm1154, %v1133, %v1048
        %v1167 = vsel %vm1154, %v1134, %v1050
        %v1168 = vsel %vm1154, %v1135, %v1052
        %v1169 = vsel %vm1154, %v1136, %v1054
        %v1170 = vsel %vm1154, %v1137, %v1056
        %v1171 = vsel %vm1154, %v1138, %v1058
        %v1172 = vsel %vm1154, %v1139, %v1060
        %v1173 = vsel %vm1154, %v1140, %v1062
        %v1174 = vsel %vm1154, %v1141, %v1064
        %v1175 = vsel %vm1154, %v1142, %v1066
        %v1176 = vsel %vm1154, %v1143, %v1068
        %v1177 = vsel %vm1154, %v1144, %v1070
        %v1178 = vsel %vm1154, %v1145, %v1072
        %v1179 = vsel %vm1154, %v1146, %v1074
        %v1180 = vsel %vm1154, %v1147, %v1076
        %v1181 = vsel %vm1154, %v1148, %v1078
        %v1182 = vsel %vm1154, %v1149, %v1080
        %v1183 = vsel %vm1154, %v1150, %v1082
        %v1184 = vsel %vm1154, %v1151, %v1084
        %v1185 = vsel %vm1154, %v1152, %v1086
        %v1186 = vsel %vm1154, %v1153, %v1088
        %v1187 = vpack.c.bf16 %v1156, %v1155
        %v1188 = vpack.c.bf16 %v1158, %v1157
        %v1189 = vpack.c.bf16 %v1160, %v1159
        %v1190 = vpack.c.bf16 %v1162, %v1161
        %v1191 = vpack.c.bf16 %v1164, %v1163
        %v1192 = vpack.c.bf16 %v1166, %v1165
        %v1193 = vpack.c.bf16 %v1168, %v1167
        %v1194 = vpack.c.bf16 %v1170, %v1169
        %v1195 = vpack.c.bf16 %v1172, %v1171
        %v1196 = vpack.c.bf16 %v1174, %v1173
        %v1197 = vpack.c.bf16 %v1176, %v1175
        %v1198 = vpack.c.bf16 %v1178, %v1177
        %v1199 = vpack.c.bf16 %v1180, %v1179
        %v1200 = vpack.c.bf16 %v1182, %v1181
        %v1201 = vpack.c.bf16 %v1184, %v1183
        %v1202 = vpack.c.bf16 %v1186, %v1185
        %1219 = vrot.lane.b32.xlu0 %v860, 32
        %v1220 = vpop.permute.xlu0 %1219
        %1221 = vrot.lane.b32.xlu0 %v861, 32
        %v1222 = vpop.permute.xlu0 %1221
        %1223 = vrot.lane.b32.xlu0 %v862, 32
        %v1224 = vpop.permute.xlu0 %1223
        %1225 = vrot.lane.b32.xlu0 %v863, 32
        %v1226 = vpop.permute.xlu0 %1225
        %1227 = vrot.lane.b32.xlu0 %v864, 32
        %v1228 = vpop.permute.xlu0 %1227
        %1229 = vrot.lane.b32.xlu0 %v865, 32
        %v1230 = vpop.permute.xlu0 %1229
        %1231 = vrot.lane.b32.xlu0 %v866, 32
        %v1232 = vpop.permute.xlu0 %1231
        %1233 = vrot.lane.b32.xlu0 %v867, 32
        %v1234 = vpop.permute.xlu0 %1233
        %1235 = vrot.lane.b32.xlu0 %v868, 32
        %v1236 = vpop.permute.xlu0 %1235
        %1237 = vrot.lane.b32.xlu0 %v869, 32
        %v1238 = vpop.permute.xlu0 %1237
        %1239 = vrot.lane.b32.xlu0 %v870, 32
        %v1240 = vpop.permute.xlu0 %1239
        %1241 = vrot.lane.b32.xlu0 %v871, 32
        %v1242 = vpop.permute.xlu0 %1241
        %1243 = vrot.lane.b32.xlu0 %v872, 32
        %v1244 = vpop.permute.xlu0 %1243
        %1245 = vrot.lane.b32.xlu0 %v873, 32
        %v1246 = vpop.permute.xlu0 %1245
        %1247 = vrot.lane.b32.xlu0 %v874, 32
        %v1248 = vpop.permute.xlu0 %1247
        %1249 = vrot.lane.b32.xlu0 %v875, 32
        %v1250 = vpop.permute.xlu0 %1249
        %1268 = vrot.lane.b32.xlu0 %v861, 64
        %v1269 = vpop.permute.xlu0 %1268
        %1270 = vrot.lane.b32.xlu0 %v862, 64
        %v1271 = vpop.permute.xlu0 %1270
        %1272 = vrot.lane.b32.xlu0 %v863, 64
        %v1273 = vpop.permute.xlu0 %1272
        %1274 = vrot.lane.b32.xlu0 %v864, 64
        %v1275 = vpop.permute.xlu0 %1274
        %1276 = vrot.lane.b32.xlu0 %v865, 64
        %v1277 = vpop.permute.xlu0 %1276
        %1278 = vrot.lane.b32.xlu0 %v866, 64
        %v1279 = vpop.permute.xlu0 %1278
        %1280 = vrot.lane.b32.xlu0 %v867, 64
        %v1281 = vpop.permute.xlu0 %1280
        %1282 = vrot.lane.b32.xlu0 %v868, 64
        %v1283 = vpop.permute.xlu0 %1282
        %1284 = vrot.lane.b32.xlu0 %v869, 64
        %v1285 = vpop.permute.xlu0 %1284
        %1286 = vrot.lane.b32.xlu0 %v870, 64
        %v1287 = vpop.permute.xlu0 %1286
        %1288 = vrot.lane.b32.xlu0 %v871, 64
        %v1289 = vpop.permute.xlu0 %1288
        %1290 = vrot.lane.b32.xlu0 %v872, 64
        %v1291 = vpop.permute.xlu0 %1290
        %1292 = vrot.lane.b32.xlu0 %v873, 64
        %v1293 = vpop.permute.xlu0 %1292
        %1294 = vrot.lane.b32.xlu0 %v874, 64
        %v1295 = vpop.permute.xlu0 %1294
        %1296 = vrot.lane.b32.xlu0 %v875, 64
        %v1297 = vpop.permute.xlu0 %1296
        %1298 = vrot.lane.b32.xlu0 %v859, 64
        %v1299 = vpop.permute.xlu0 %1298
        %v1316 = vsel %vm1121, %v859, %v1220
        %v1317 = vsel %vm1121, %v860, %v1222
        %v1318 = vsel %vm1121, %v861, %v1224
        %v1319 = vsel %vm1121, %v862, %v1226
        %v1320 = vsel %vm1121, %v863, %v1228
        %v1321 = vsel %vm1121, %v864, %v1230
        %v1322 = vsel %vm1121, %v865, %v1232
        %v1323 = vsel %vm1121, %v866, %v1234
        %v1324 = vsel %vm1121, %v867, %v1236
        %v1325 = vsel %vm1121, %v868, %v1238
        %v1326 = vsel %vm1121, %v869, %v1240
        %v1327 = vsel %vm1121, %v870, %v1242
        %v1328 = vsel %vm1121, %v871, %v1244
        %v1329 = vsel %vm1121, %v872, %v1246
        %v1330 = vsel %vm1121, %v873, %v1248
        %v1331 = vsel %vm1121, %v874, %v1250
        %v1332 = vsel %vm1154, %v1316, %v1269
        %v1333 = vsel %vm1154, %v1317, %v1271
        %v1334 = vsel %vm1154, %v1318, %v1273
        %v1335 = vsel %vm1154, %v1319, %v1275
        %v1336 = vsel %vm1154, %v1320, %v1277
        %v1337 = vsel %vm1154, %v1321, %v1279
        %v1338 = vsel %vm1154, %v1322, %v1281
        %v1339 = vsel %vm1154, %v1323, %v1283
        %v1340 = vsel %vm1154, %v1324, %v1285
        %v1341 = vsel %vm1154, %v1325, %v1287
        %v1342 = vsel %vm1154, %v1326, %v1289
        %v1343 = vsel %vm1154, %v1327, %v1291
        %v1344 = vsel %vm1154, %v1328, %v1293
        %v1345 = vsel %vm1154, %v1329, %v1295
        %v1346 = vsel %vm1154, %v1330, %v1297
        %v1347 = vsel %vm1154, %v1331, %v1299
        %vm1396 = vcmask 1046528
        %v1397 = vrot.slane %v1155, 1
        %v1398 = vrot.slane %v1156, 1
        %v1399 = vsel %vm1396, %v1397, %v1398
        %v1400 = vrot.slane %v1332, 1
        %v1401 = vsel %vm1396, %v1398, %v1400
        %v1402 = vrot.slane %v1157, 1
        %v1403 = vrot.slane %v1158, 1
        %v1404 = vsel %vm1396, %v1402, %v1403
        %v1405 = vrot.slane %v1333, 1
        %v1406 = vsel %vm1396, %v1403, %v1405
        %v1407 = vrot.slane %v1159, 1
        %v1408 = vrot.slane %v1160, 1
        %v1409 = vsel %vm1396, %v1407, %v1408
        %v1410 = vrot.slane %v1334, 1
        %v1411 = vsel %vm1396, %v1408, %v1410
        %v1412 = vrot.slane %v1161, 1
        %v1413 = vrot.slane %v1162, 1
        %v1414 = vsel %vm1396, %v1412, %v1413
        %v1415 = vrot.slane %v1335, 1
        %v1416 = vsel %vm1396, %v1413, %v1415
        %v1417 = vrot.slane %v1163, 1
        %v1418 = vrot.slane %v1164, 1
        %v1419 = vsel %vm1396, %v1417, %v1418
        %v1420 = vrot.slane %v1336, 1
        %v1421 = vsel %vm1396, %v1418, %v1420
        %v1422 = vrot.slane %v1165, 1
        %v1423 = vrot.slane %v1166, 1
        %v1424 = vsel %vm1396, %v1422, %v1423
        %v1425 = vrot.slane %v1337, 1
        %v1426 = vsel %vm1396, %v1423, %v1425
        %v1427 = vrot.slane %v1167, 1
        %v1428 = vrot.slane %v1168, 1
        %v1429 = vsel %vm1396, %v1427, %v1428
        %v1430 = vrot.slane %v1338, 1
        %v1431 = vsel %vm1396, %v1428, %v1430
        %v1432 = vrot.slane %v1169, 1
        %v1433 = vrot.slane %v1170, 1
        %v1434 = vsel %vm1396, %v1432, %v1433
        %v1435 = vrot.slane %v1339, 1
        %v1436 = vsel %vm1396, %v1433, %v1435
        %v1437 = vrot.slane %v1171, 1
        %v1438 = vrot.slane %v1172, 1
        %v1439 = vsel %vm1396, %v1437, %v1438
        %v1440 = vrot.slane %v1340, 1
        %v1441 = vsel %vm1396, %v1438, %v1440
        %v1442 = vrot.slane %v1173, 1
        %v1443 = vrot.slane %v1174, 1
        %v1444 = vsel %vm1396, %v1442, %v1443
        %v1445 = vrot.slane %v1341, 1
        %v1446 = vsel %vm1396, %v1443, %v1445
        %v1447 = vrot.slane %v1175, 1
        %v1448 = vrot.slane %v1176, 1
        %v1449 = vsel %vm1396, %v1447, %v1448
        %v1450 = vrot.slane %v1342, 1
        %v1451 = vsel %vm1396, %v1448, %v1450
        %v1452 = vrot.slane %v1177, 1
        %v1453 = vrot.slane %v1178, 1
        %v1454 = vsel %vm1396, %v1452, %v1453
        %v1455 = vrot.slane %v1343, 1
        %v1456 = vsel %vm1396, %v1453, %v1455
        %v1457 = vrot.slane %v1179, 1
        %v1458 = vrot.slane %v1180, 1
        %v1459 = vsel %vm1396, %v1457, %v1458
        %v1460 = vrot.slane %v1344, 1
        %v1461 = vsel %vm1396, %v1458, %v1460
        %v1462 = vrot.slane %v1181, 1
        %v1463 = vrot.slane %v1182, 1
        %v1464 = vsel %vm1396, %v1462, %v1463
        %v1465 = vrot.slane %v1345, 1
        %v1466 = vsel %vm1396, %v1463, %v1465
        %v1467 = vrot.slane %v1183, 1
        %v1468 = vrot.slane %v1184, 1
        %v1469 = vsel %vm1396, %v1467, %v1468
        %v1470 = vrot.slane %v1346, 1
        %v1471 = vsel %vm1396, %v1468, %v1470
        %v1472 = vrot.slane %v1185, 1
        %v1473 = vrot.slane %v1186, 1
        %v1474 = vsel %vm1396, %v1472, %v1473
        %v1475 = vrot.slane %v1347, 1
        %v1476 = vsel %vm1396, %v1473, %v1475
        %v1509 = vpack.c.bf16 %v1401, %v1399
        %v1510 = vpack.c.bf16 %v1406, %v1404
        %v1511 = vpack.c.bf16 %v1411, %v1409
        %v1512 = vpack.c.bf16 %v1416, %v1414
        %v1513 = vpack.c.bf16 %v1421, %v1419
        %v1514 = vpack.c.bf16 %v1426, %v1424
        %v1515 = vpack.c.bf16 %v1431, %v1429
        %v1516 = vpack.c.bf16 %v1436, %v1434
        %v1517 = vpack.c.bf16 %v1441, %v1439
        %v1518 = vpack.c.bf16 %v1446, %v1444
        %v1519 = vpack.c.bf16 %v1451, %v1449
        %v1520 = vpack.c.bf16 %v1456, %v1454
        %v1521 = vpack.c.bf16 %v1461, %v1459
        %v1522 = vpack.c.bf16 %v1466, %v1464
        %v1523 = vpack.c.bf16 %v1471, %v1469
        %v1524 = vpack.c.bf16 %v1476, %v1474
        %v1537 = vunpack.c.l.b16 %v888
        %v1538 = vunpack.c.l.b16 %v889
        %v1539 = vunpack.c.l.b16 %v890
        %v1540 = vunpack.c.l.b16 %v891
        %v1541 = vunpack.c.l.b16 %v892
        %v1542 = vunpack.c.l.b16 %v893
        %v1543 = vunpack.c.l.b16 %v894
        %v1544 = vunpack.c.l.b16 %v895
        %v1545 = vunpack.c.l.b16 %v896
        %v1546 = vunpack.c.l.b16 %v897
        %v1547 = vunpack.c.l.b16 %v898
        %v1548 = vunpack.c.l.b16 %v899
        %v1549 = vpack.c.b16 %v1538, %v1537
        %v1550 = vpack.c.b16 %v1540, %v1539
        %v1551 = vpack.c.b16 %v1542, %v1541
        %v1552 = vpack.c.b16 %v1544, %v1543
        %v1553 = vpack.c.b16 %v1546, %v1545
        %v1554 = vpack.c.b16 %v1548, %v1547
        %vm1561 = vcmask 785408
        %v1563 = vsel %vm1561, %v1509, 0
        %v1566 = vsel %vm1561, %v1510, 0
        %v1569 = vsel %vm1561, %v1511, 0
        %v1572 = vsel %vm1561, %v1512, 0
        %v1575 = vsel %vm1561, %v1513, 0
        %v1578 = vsel %vm1561, %v1514, 0
        %v1581 = vsel %vm1561, %v1515, 0
        %v1584 = vsel %vm1561, %v1516, 0
        %v1587 = vsel %vm1561, %v1517, 0
        %v1590 = vsel %vm1561, %v1518, 0
        %v1593 = vsel %vm1561, %v1519, 0
        %v1596 = vsel %vm1561, %v1520, 0
        %v1599 = vsel %vm1561, %v1521, 0
        %v1602 = vsel %vm1561, %v1522, 0
        %v1605 = vsel %vm1561, %v1523, 0
        %v1608 = vsel %vm1561, %v1524, 0
        %1610 = vmatpush.bf16.msra.mxu0 0
        %1611 = vmatpush.bf16.msra.mxu0 0
        %1612 = vmatpush.bf16.msra.mxu0 %v1554
        %1613 = vmatpush.bf16.msra.mxu0 %v1553
        %1614 = vmatpush.bf16.msra.mxu0 %v1552
        %1615 = vmatpush.bf16.msra.mxu0 %v1551
        %1616 = vmatpush.bf16.msra.mxu0 %v1550
        %1617 = vmatpush.bf16.msra.mxu0 %v1549
        %1618 = vmatmul.bf16.gmra.mxu0 %v1563
        %v1619 = vpop.f32.mrf.mxu0
        %v1620 = vadd.f32 0.0, %v1619
        %v1621 = vpop.f32.mrf.mxu0
        %v1622 = vadd.f32 0.0, %v1621
        %1623 = vmatmul.bf16.gmra.mxu0 %v1566
        %v1624 = vpop.f32.mrf.mxu0
        %v1625 = vadd.f32 0.0, %v1624
        %v1626 = vpop.f32.mrf.mxu0
        %v1627 = vadd.f32 0.0, %v1626
        %1628 = vmatmul.bf16.gmra.mxu0 %v1569
        %v1629 = vpop.f32.mrf.mxu0
        %v1630 = vadd.f32 0.0, %v1629
        %v1631 = vpop.f32.mrf.mxu0
        %v1632 = vadd.f32 0.0, %v1631
        %1633 = vmatmul.bf16.gmra.mxu0 %v1572
        %v1634 = vpop.f32.mrf.mxu0
        %v1635 = vadd.f32 0.0, %v1634
        %v1636 = vpop.f32.mrf.mxu0
        %v1637 = vadd.f32 0.0, %v1636
        %1638 = vmatmul.bf16.gmra.mxu0 %v1575
        %v1639 = vpop.f32.mrf.mxu0
        %v1640 = vadd.f32 0.0, %v1639
        %v1641 = vpop.f32.mrf.mxu0
        %v1642 = vadd.f32 0.0, %v1641
        %1643 = vmatmul.bf16.gmra.mxu0 %v1578
        %v1644 = vpop.f32.mrf.mxu0
        %v1645 = vadd.f32 0.0, %v1644
        %v1646 = vpop.f32.mrf.mxu0
        %v1647 = vadd.f32 0.0, %v1646
        %1648 = vmatmul.bf16.gmra.mxu0 %v1581
        %v1649 = vpop.f32.mrf.mxu0
        %v1650 = vadd.f32 0.0, %v1649
        %v1651 = vpop.f32.mrf.mxu0
        %v1652 = vadd.f32 0.0, %v1651
        %1653 = vmatmul.bf16.gmra.mxu0 %v1584
        %v1654 = vpop.f32.mrf.mxu0
        %v1655 = vadd.f32 0.0, %v1654
        %v1656 = vpop.f32.mrf.mxu0
        %v1657 = vadd.f32 0.0, %v1656
        %1658 = vmatmul.bf16.gmra.mxu0 %v1587
        %v1659 = vpop.f32.mrf.mxu0
        %v1660 = vadd.f32 0.0, %v1659
        %v1661 = vpop.f32.mrf.mxu0
        %v1662 = vadd.f32 0.0, %v1661
        %1663 = vmatmul.bf16.gmra.mxu0 %v1590
        %v1664 = vpop.f32.mrf.mxu0
        %v1665 = vadd.f32 0.0, %v1664
        %v1666 = vpop.f32.mrf.mxu0
        %v1667 = vadd.f32 0.0, %v1666
        %1668 = vmatmul.bf16.gmra.mxu0 %v1593
        %v1669 = vpop.f32.mrf.mxu0
        %v1670 = vadd.f32 0.0, %v1669
        %v1671 = vpop.f32.mrf.mxu0
        %v1672 = vadd.f32 0.0, %v1671
        %1673 = vmatmul.bf16.gmra.mxu0 %v1596
        %v1674 = vpop.f32.mrf.mxu0
        %v1675 = vadd.f32 0.0, %v1674
        %v1676 = vpop.f32.mrf.mxu0
        %v1677 = vadd.f32 0.0, %v1676
        %1678 = vmatmul.bf16.gmra.mxu0 %v1599
        %v1679 = vpop.f32.mrf.mxu0
        %v1680 = vadd.f32 0.0, %v1679
        %v1681 = vpop.f32.mrf.mxu0
        %v1682 = vadd.f32 0.0, %v1681
        %1683 = vmatmul.bf16.gmra.mxu0 %v1602
        %v1684 = vpop.f32.mrf.mxu0
        %v1685 = vadd.f32 0.0, %v1684
        %v1686 = vpop.f32.mrf.mxu0
        %v1687 = vadd.f32 0.0, %v1686
        %1688 = vmatmul.bf16.gmra.mxu0 %v1605
        %v1689 = vpop.f32.mrf.mxu0
        %v1690 = vadd.f32 0.0, %v1689
        %v1691 = vpop.f32.mrf.mxu0
        %v1692 = vadd.f32 0.0, %v1691
        %1693 = vmatmul.bf16.gmra.mxu0 %v1608
        %v1694 = vpop.f32.mrf.mxu0
        %v1695 = vadd.f32 0.0, %v1694
        %v1696 = vpop.f32.mrf.mxu0
        %v1697 = vadd.f32 0.0, %v1696
        %1698 = vdwg.mxu0
        %v1711 = vunpack.c.l.b16 %v876
        %v1712 = vunpack.c.l.b16 %v877
        %v1713 = vunpack.c.l.b16 %v878
        %v1714 = vunpack.c.l.b16 %v879
        %v1715 = vunpack.c.l.b16 %v880
        %v1716 = vunpack.c.l.b16 %v881
        %v1717 = vunpack.c.l.b16 %v882
        %v1718 = vunpack.c.l.b16 %v883
        %v1719 = vunpack.c.l.b16 %v884
        %v1720 = vunpack.c.l.b16 %v885
        %v1721 = vunpack.c.l.b16 %v886
        %v1722 = vunpack.c.l.b16 %v887
        %v1723 = vpack.c.b16 %v1712, %v1711
        %v1724 = vpack.c.b16 %v1714, %v1713
        %v1725 = vpack.c.b16 %v1716, %v1715
        %v1726 = vpack.c.b16 %v1718, %v1717
        %v1727 = vpack.c.b16 %v1720, %v1719
        %v1728 = vpack.c.b16 %v1722, %v1721
        %v1736 = vsel %vm1561, %v1187, 0
        %v1739 = vsel %vm1561, %v1188, 0
        %v1742 = vsel %vm1561, %v1189, 0
        %v1745 = vsel %vm1561, %v1190, 0
        %v1748 = vsel %vm1561, %v1191, 0
        %v1751 = vsel %vm1561, %v1192, 0
        %v1754 = vsel %vm1561, %v1193, 0
        %v1757 = vsel %vm1561, %v1194, 0
        %v1760 = vsel %vm1561, %v1195, 0
        %v1763 = vsel %vm1561, %v1196, 0
        %v1766 = vsel %vm1561, %v1197, 0
        %v1769 = vsel %vm1561, %v1198, 0
        %v1772 = vsel %vm1561, %v1199, 0
        %v1775 = vsel %vm1561, %v1200, 0
        %v1778 = vsel %vm1561, %v1201, 0
        %v1781 = vsel %vm1561, %v1202, 0
        %1783 = vmatpush.bf16.msra.mxu0 0
        %1784 = vmatpush.bf16.msra.mxu0 0
        %1785 = vmatpush.bf16.msra.mxu0 %v1728
        %1786 = vmatpush.bf16.msra.mxu0 %v1727
        %1787 = vmatpush.bf16.msra.mxu0 %v1726
        %1788 = vmatpush.bf16.msra.mxu0 %v1725
        %1789 = vmatpush.bf16.msra.mxu0 %v1724
        %1790 = vmatpush.bf16.msra.mxu0 %v1723
        %1791 = vmatmul.bf16.gmra.mxu0 %v1736
        %v1792 = vpop.f32.mrf.mxu0
        %v1793 = vadd.f32 %v1620, %v1792
        %v1794 = vpop.f32.mrf.mxu0
        %v1795 = vadd.f32 %v1622, %v1794
        %1796 = vmatmul.bf16.gmra.mxu0 %v1739
        %v1797 = vpop.f32.mrf.mxu0
        %v1798 = vadd.f32 %v1625, %v1797
        %v1799 = vpop.f32.mrf.mxu0
        %v1800 = vadd.f32 %v1627, %v1799
        %1801 = vmatmul.bf16.gmra.mxu0 %v1742
        %v1802 = vpop.f32.mrf.mxu0
        %v1803 = vadd.f32 %v1630, %v1802
        %v1804 = vpop.f32.mrf.mxu0
        %v1805 = vadd.f32 %v1632, %v1804
        %1806 = vmatmul.bf16.gmra.mxu0 %v1745
        %v1807 = vpop.f32.mrf.mxu0
        %v1808 = vadd.f32 %v1635, %v1807
        %v1809 = vpop.f32.mrf.mxu0
        %v1810 = vadd.f32 %v1637, %v1809
        %1811 = vmatmul.bf16.gmra.mxu0 %v1748
        %v1812 = vpop.f32.mrf.mxu0
        %v1813 = vadd.f32 %v1640, %v1812
        %v1814 = vpop.f32.mrf.mxu0
        %v1815 = vadd.f32 %v1642, %v1814
        %1816 = vmatmul.bf16.gmra.mxu0 %v1751
        %v1817 = vpop.f32.mrf.mxu0
        %v1818 = vadd.f32 %v1645, %v1817
        %v1819 = vpop.f32.mrf.mxu0
        %v1820 = vadd.f32 %v1647, %v1819
        %1821 = vmatmul.bf16.gmra.mxu0 %v1754
        %v1822 = vpop.f32.mrf.mxu0
        %v1823 = vadd.f32 %v1650, %v1822
        %v1824 = vpop.f32.mrf.mxu0
        %v1825 = vadd.f32 %v1652, %v1824
        %1826 = vmatmul.bf16.gmra.mxu0 %v1757
        %v1827 = vpop.f32.mrf.mxu0
        %v1828 = vadd.f32 %v1655, %v1827
        %v1829 = vpop.f32.mrf.mxu0
        %v1830 = vadd.f32 %v1657, %v1829
        %1831 = vmatmul.bf16.gmra.mxu0 %v1760
        %v1832 = vpop.f32.mrf.mxu0
        %v1833 = vadd.f32 %v1660, %v1832
        %v1834 = vpop.f32.mrf.mxu0
        %v1835 = vadd.f32 %v1662, %v1834
        %1836 = vmatmul.bf16.gmra.mxu0 %v1763
        %v1837 = vpop.f32.mrf.mxu0
        %v1838 = vadd.f32 %v1665, %v1837
        %v1839 = vpop.f32.mrf.mxu0
        %v1840 = vadd.f32 %v1667, %v1839
        %1841 = vmatmul.bf16.gmra.mxu0 %v1766
        %v1842 = vpop.f32.mrf.mxu0
        %v1843 = vadd.f32 %v1670, %v1842
        %v1844 = vpop.f32.mrf.mxu0
        %v1845 = vadd.f32 %v1672, %v1844
        %1846 = vmatmul.bf16.gmra.mxu0 %v1769
        %v1847 = vpop.f32.mrf.mxu0
        %v1848 = vadd.f32 %v1675, %v1847
        %v1849 = vpop.f32.mrf.mxu0
        %v1850 = vadd.f32 %v1677, %v1849
        %1851 = vmatmul.bf16.gmra.mxu0 %v1772
        %v1852 = vpop.f32.mrf.mxu0
        %v1853 = vadd.f32 %v1680, %v1852
        %v1854 = vpop.f32.mrf.mxu0
        %v1855 = vadd.f32 %v1682, %v1854
        %1856 = vmatmul.bf16.gmra.mxu0 %v1775
        %v1857 = vpop.f32.mrf.mxu0
        %v1858 = vadd.f32 %v1685, %v1857
        %v1859 = vpop.f32.mrf.mxu0
        %v1860 = vadd.f32 %v1687, %v1859
        %1861 = vmatmul.bf16.gmra.mxu0 %v1778
        %v1862 = vpop.f32.mrf.mxu0
        %v1863 = vadd.f32 %v1690, %v1862
        %v1864 = vpop.f32.mrf.mxu0
        %v1865 = vadd.f32 %v1692, %v1864
        %1866 = vmatmul.bf16.gmra.mxu0 %v1781
        %v1867 = vpop.f32.mrf.mxu0
        %v1868 = vadd.f32 %v1695, %v1867
        %v1869 = vpop.f32.mrf.mxu0
        %v1870 = vadd.f32 %v1697, %v1869
        %1871 = vdwg.mxu0
        %vm1872 = vcmask 1045504
        %v1873 = vrot.slane %v1155, 2
        %v1874 = vrot.slane %v1156, 2
        %v1875 = vsel %vm1872, %v1873, %v1874
        %v1876 = vrot.slane %v1332, 2
        %v1877 = vsel %vm1872, %v1874, %v1876
        %v1878 = vrot.slane %v1157, 2
        %v1879 = vrot.slane %v1158, 2
        %v1880 = vsel %vm1872, %v1878, %v1879
        %v1881 = vrot.slane %v1333, 2
        %v1882 = vsel %vm1872, %v1879, %v1881
        %v1883 = vrot.slane %v1159, 2
        %v1884 = vrot.slane %v1160, 2
        %v1885 = vsel %vm1872, %v1883, %v1884
        %v1886 = vrot.slane %v1334, 2
        %v1887 = vsel %vm1872, %v1884, %v1886
        %v1888 = vrot.slane %v1161, 2
        %v1889 = vrot.slane %v1162, 2
        %v1890 = vsel %vm1872, %v1888, %v1889
        %v1891 = vrot.slane %v1335, 2
        %v1892 = vsel %vm1872, %v1889, %v1891
        %v1893 = vrot.slane %v1163, 2
        %v1894 = vrot.slane %v1164, 2
        %v1895 = vsel %vm1872, %v1893, %v1894
        %v1896 = vrot.slane %v1336, 2
        %v1897 = vsel %vm1872, %v1894, %v1896
        %v1898 = vrot.slane %v1165, 2
        %v1899 = vrot.slane %v1166, 2
        %v1900 = vsel %vm1872, %v1898, %v1899
        %v1901 = vrot.slane %v1337, 2
        %v1902 = vsel %vm1872, %v1899, %v1901
        %v1903 = vrot.slane %v1167, 2
        %v1904 = vrot.slane %v1168, 2
        %v1905 = vsel %vm1872, %v1903, %v1904
        %v1906 = vrot.slane %v1338, 2
        %v1907 = vsel %vm1872, %v1904, %v1906
        %v1908 = vrot.slane %v1169, 2
        %v1909 = vrot.slane %v1170, 2
        %v1910 = vsel %vm1872, %v1908, %v1909
        %v1911 = vrot.slane %v1339, 2
        %v1912 = vsel %vm1872, %v1909, %v1911
        %v1913 = vrot.slane %v1171, 2
        %v1914 = vrot.slane %v1172, 2
        %v1915 = vsel %vm1872, %v1913, %v1914
        %v1916 = vrot.slane %v1340, 2
        %v1917 = vsel %vm1872, %v1914, %v1916
        %v1918 = vrot.slane %v1173, 2
        %v1919 = vrot.slane %v1174, 2
        %v1920 = vsel %vm1872, %v1918, %v1919
        %v1921 = vrot.slane %v1341, 2
        %v1922 = vsel %vm1872, %v1919, %v1921
        %v1923 = vrot.slane %v1175, 2
        %v1924 = vrot.slane %v1176, 2
        %v1925 = vsel %vm1872, %v1923, %v1924
        %v1926 = vrot.slane %v1342, 2
        %v1927 = vsel %vm1872, %v1924, %v1926
        %v1928 = vrot.slane %v1177, 2
        %v1929 = vrot.slane %v1178, 2
        %v1930 = vsel %vm1872, %v1928, %v1929
        %v1931 = vrot.slane %v1343, 2
        %v1932 = vsel %vm1872, %v1929, %v1931
        %v1933 = vrot.slane %v1179, 2
        %v1934 = vrot.slane %v1180, 2
        %v1935 = vsel %vm1872, %v1933, %v1934
        %v1936 = vrot.slane %v1344, 2
        %v1937 = vsel %vm1872, %v1934, %v1936
        %v1938 = vrot.slane %v1181, 2
        %v1939 = vrot.slane %v1182, 2
        %v1940 = vsel %vm1872, %v1938, %v1939
        %v1941 = vrot.slane %v1345, 2
        %v1942 = vsel %vm1872, %v1939, %v1941
        %v1943 = vrot.slane %v1183, 2
        %v1944 = vrot.slane %v1184, 2
        %v1945 = vsel %vm1872, %v1943, %v1944
        %v1946 = vrot.slane %v1346, 2
        %v1947 = vsel %vm1872, %v1944, %v1946
        %v1948 = vrot.slane %v1185, 2
        %v1949 = vrot.slane %v1186, 2
        %v1950 = vsel %vm1872, %v1948, %v1949
        %v1951 = vrot.slane %v1347, 2
        %v1952 = vsel %vm1872, %v1949, %v1951
        %v1985 = vpack.c.bf16 %v1877, %v1875
        %v1986 = vpack.c.bf16 %v1882, %v1880
        %v1987 = vpack.c.bf16 %v1887, %v1885
        %v1988 = vpack.c.bf16 %v1892, %v1890
        %v1989 = vpack.c.bf16 %v1897, %v1895
        %v1990 = vpack.c.bf16 %v1902, %v1900
        %v1991 = vpack.c.bf16 %v1907, %v1905
        %v1992 = vpack.c.bf16 %v1912, %v1910
        %v1993 = vpack.c.bf16 %v1917, %v1915
        %v1994 = vpack.c.bf16 %v1922, %v1920
        %v1995 = vpack.c.bf16 %v1927, %v1925
        %v1996 = vpack.c.bf16 %v1932, %v1930
        %v1997 = vpack.c.bf16 %v1937, %v1935
        %v1998 = vpack.c.bf16 %v1942, %v1940
        %v1999 = vpack.c.bf16 %v1947, %v1945
        %v2000 = vpack.c.bf16 %v1952, %v1950
        %v2013 = vunpack.c.l.b16 %v900
        %v2014 = vunpack.c.l.b16 %v901
        %v2015 = vunpack.c.l.b16 %v902
        %v2016 = vunpack.c.l.b16 %v903
        %v2017 = vunpack.c.l.b16 %v904
        %v2018 = vunpack.c.l.b16 %v905
        %v2019 = vunpack.c.l.b16 %v906
        %v2020 = vunpack.c.l.b16 %v907
        %v2021 = vunpack.c.l.b16 %v908
        %v2022 = vunpack.c.l.b16 %v909
        %v2023 = vunpack.c.l.b16 %v910
        %v2024 = vunpack.c.l.b16 %v911
        %v2025 = vpack.c.b16 %v2014, %v2013
        %v2026 = vpack.c.b16 %v2016, %v2015
        %v2027 = vpack.c.b16 %v2018, %v2017
        %v2028 = vpack.c.b16 %v2020, %v2019
        %v2029 = vpack.c.b16 %v2022, %v2021
        %v2030 = vpack.c.b16 %v2024, %v2023
        %v2038 = vsel %vm1561, %v1985, 0
        %v2041 = vsel %vm1561, %v1986, 0
        %v2044 = vsel %vm1561, %v1987, 0
        %v2047 = vsel %vm1561, %v1988, 0
        %v2050 = vsel %vm1561, %v1989, 0
        %v2053 = vsel %vm1561, %v1990, 0
        %v2056 = vsel %vm1561, %v1991, 0
        %v2059 = vsel %vm1561, %v1992, 0
        %v2062 = vsel %vm1561, %v1993, 0
        %v2065 = vsel %vm1561, %v1994, 0
        %v2068 = vsel %vm1561, %v1995, 0
        %v2071 = vsel %vm1561, %v1996, 0
        %v2074 = vsel %vm1561, %v1997, 0
        %v2077 = vsel %vm1561, %v1998, 0
        %v2080 = vsel %vm1561, %v1999, 0
        %v2083 = vsel %vm1561, %v2000, 0
        %2085 = vmatpush.bf16.msra.mxu0 0
        %2086 = vmatpush.bf16.msra.mxu0 0
        %2087 = vmatpush.bf16.msra.mxu0 %v2030
        %2088 = vmatpush.bf16.msra.mxu0 %v2029
        %2089 = vmatpush.bf16.msra.mxu0 %v2028
        %2090 = vmatpush.bf16.msra.mxu0 %v2027
        %2091 = vmatpush.bf16.msra.mxu0 %v2026
        %2092 = vmatpush.bf16.msra.mxu0 %v2025
        %2093 = vmatmul.bf16.gmra.mxu0 %v2038
        %v2094 = vpop.f32.mrf.mxu0
        %v2095 = vadd.f32 0.0, %v2094
        %v2096 = vpop.f32.mrf.mxu0
        %v2097 = vadd.f32 0.0, %v2096
        %2098 = vmatmul.bf16.gmra.mxu0 %v2041
        %v2099 = vpop.f32.mrf.mxu0
        %v2100 = vadd.f32 0.0, %v2099
        %v2101 = vpop.f32.mrf.mxu0
        %v2102 = vadd.f32 0.0, %v2101
        %2103 = vmatmul.bf16.gmra.mxu0 %v2044
        %v2104 = vpop.f32.mrf.mxu0
        %v2105 = vadd.f32 0.0, %v2104
        %v2106 = vpop.f32.mrf.mxu0
        %v2107 = vadd.f32 0.0, %v2106
        %2108 = vmatmul.bf16.gmra.mxu0 %v2047
        %v2109 = vpop.f32.mrf.mxu0
        %v2110 = vadd.f32 0.0, %v2109
        %v2111 = vpop.f32.mrf.mxu0
        %v2112 = vadd.f32 0.0, %v2111
        %2113 = vmatmul.bf16.gmra.mxu0 %v2050
        %v2114 = vpop.f32.mrf.mxu0
        %v2115 = vadd.f32 0.0, %v2114
        %v2116 = vpop.f32.mrf.mxu0
        %v2117 = vadd.f32 0.0, %v2116
        %2118 = vmatmul.bf16.gmra.mxu0 %v2053
        %v2119 = vpop.f32.mrf.mxu0
        %v2120 = vadd.f32 0.0, %v2119
        %v2121 = vpop.f32.mrf.mxu0
        %v2122 = vadd.f32 0.0, %v2121
        %2123 = vmatmul.bf16.gmra.mxu0 %v2056
        %v2124 = vpop.f32.mrf.mxu0
        %v2125 = vadd.f32 0.0, %v2124
        %v2126 = vpop.f32.mrf.mxu0
        %v2127 = vadd.f32 0.0, %v2126
        %2128 = vmatmul.bf16.gmra.mxu0 %v2059
        %v2129 = vpop.f32.mrf.mxu0
        %v2130 = vadd.f32 0.0, %v2129
        %v2131 = vpop.f32.mrf.mxu0
        %v2132 = vadd.f32 0.0, %v2131
        %2133 = vmatmul.bf16.gmra.mxu0 %v2062
        %v2134 = vpop.f32.mrf.mxu0
        %v2135 = vadd.f32 0.0, %v2134
        %v2136 = vpop.f32.mrf.mxu0
        %v2137 = vadd.f32 0.0, %v2136
        %2138 = vmatmul.bf16.gmra.mxu0 %v2065
        %v2139 = vpop.f32.mrf.mxu0
        %v2140 = vadd.f32 0.0, %v2139
        %v2141 = vpop.f32.mrf.mxu0
        %v2142 = vadd.f32 0.0, %v2141
        %2143 = vmatmul.bf16.gmra.mxu0 %v2068
        %v2144 = vpop.f32.mrf.mxu0
        %v2145 = vadd.f32 0.0, %v2144
        %v2146 = vpop.f32.mrf.mxu0
        %v2147 = vadd.f32 0.0, %v2146
        %2148 = vmatmul.bf16.gmra.mxu0 %v2071
        %v2149 = vpop.f32.mrf.mxu0
        %v2150 = vadd.f32 0.0, %v2149
        %v2151 = vpop.f32.mrf.mxu0
        %v2152 = vadd.f32 0.0, %v2151
        %2153 = vmatmul.bf16.gmra.mxu0 %v2074
        %v2154 = vpop.f32.mrf.mxu0
        %v2155 = vadd.f32 0.0, %v2154
        %v2156 = vpop.f32.mrf.mxu0
        %v2157 = vadd.f32 0.0, %v2156
        %2158 = vmatmul.bf16.gmra.mxu0 %v2077
        %v2159 = vpop.f32.mrf.mxu0
        %v2160 = vadd.f32 0.0, %v2159
        %v2161 = vpop.f32.mrf.mxu0
        %v2162 = vadd.f32 0.0, %v2161
        %2163 = vmatmul.bf16.gmra.mxu0 %v2080
        %v2164 = vpop.f32.mrf.mxu0
        %v2165 = vadd.f32 0.0, %v2164
        %v2166 = vpop.f32.mrf.mxu0
        %v2167 = vadd.f32 0.0, %v2166
        %2168 = vmatmul.bf16.gmra.mxu0 %v2083
        %v2169 = vpop.f32.mrf.mxu0
        %v2170 = vadd.f32 0.0, %v2169
        %v2171 = vpop.f32.mrf.mxu0
        %v2172 = vadd.f32 0.0, %v2171
        %2173 = vdwg.mxu0
        %v2174 = vadd.f32 %v1793, %v2095
        %v2175 = vadd.f32 %v1795, %v2097
        %v2176 = vadd.f32 %v1798, %v2100
        %v2177 = vadd.f32 %v1800, %v2102
        %v2178 = vadd.f32 %v1803, %v2105
        %v2179 = vadd.f32 %v1805, %v2107
        %v2180 = vadd.f32 %v1808, %v2110
        %v2181 = vadd.f32 %v1810, %v2112
        %v2182 = vadd.f32 %v1813, %v2115
        %v2183 = vadd.f32 %v1815, %v2117
        %v2184 = vadd.f32 %v1818, %v2120
        %v2185 = vadd.f32 %v1820, %v2122
        %v2186 = vadd.f32 %v1823, %v2125
        %v2187 = vadd.f32 %v1825, %v2127
        %v2188 = vadd.f32 %v1828, %v2130
        %v2189 = vadd.f32 %v1830, %v2132
        %v2190 = vadd.f32 %v1833, %v2135
        %v2191 = vadd.f32 %v1835, %v2137
        %v2192 = vadd.f32 %v1838, %v2140
        %v2193 = vadd.f32 %v1840, %v2142
        %v2194 = vadd.f32 %v1843, %v2145
        %v2195 = vadd.f32 %v1845, %v2147
        %v2196 = vadd.f32 %v1848, %v2150
        %v2197 = vadd.f32 %v1850, %v2152
        %v2198 = vadd.f32 %v1853, %v2155
        %v2199 = vadd.f32 %v1855, %v2157
        %v2200 = vadd.f32 %v1858, %v2160
        %v2201 = vadd.f32 %v1860, %v2162
        %v2202 = vadd.f32 %v1863, %v2165
        %v2203 = vadd.f32 %v1865, %v2167
        %v2204 = vadd.f32 %v1868, %v2170
        %v2205 = vadd.f32 %v1870, %v2172
        %v2206 = vld [vmem:[%s4] sm:$0x1]
        %v2208 = vperm.slane %v2206, 0
        %v2210 = vadd.f32 %v2174, %v2208
        %v2211 = vadd.f32 %v2175, %v2208
        %v2212 = vadd.f32 %v2176, %v2208
        %v2213 = vadd.f32 %v2177, %v2208
        %v2214 = vadd.f32 %v2178, %v2208
        %v2215 = vadd.f32 %v2179, %v2208
        %v2216 = vadd.f32 %v2180, %v2208
        %v2217 = vadd.f32 %v2181, %v2208
        %v2218 = vadd.f32 %v2182, %v2208
        %v2219 = vadd.f32 %v2183, %v2208
        %v2220 = vadd.f32 %v2184, %v2208
        %v2221 = vadd.f32 %v2185, %v2208
        %v2222 = vadd.f32 %v2186, %v2208
        %v2223 = vadd.f32 %v2187, %v2208
        %v2224 = vadd.f32 %v2188, %v2208
        %v2225 = vadd.f32 %v2189, %v2208
        %v2226 = vadd.f32 %v2190, %v2208
        %v2227 = vadd.f32 %v2191, %v2208
        %v2228 = vadd.f32 %v2192, %v2208
        %v2229 = vadd.f32 %v2193, %v2208
        %v2230 = vadd.f32 %v2194, %v2208
        %v2231 = vadd.f32 %v2195, %v2208
        %v2232 = vadd.f32 %v2196, %v2208
        %v2233 = vadd.f32 %v2197, %v2208
        %v2234 = vadd.f32 %v2198, %v2208
        %v2235 = vadd.f32 %v2199, %v2208
        %v2236 = vadd.f32 %v2200, %v2208
        %v2237 = vadd.f32 %v2201, %v2208
        %v2238 = vadd.f32 %v2202, %v2208
        %v2239 = vadd.f32 %v2203, %v2208
        %v2240 = vadd.f32 %v2204, %v2208
        %v2241 = vadd.f32 %v2205, %v2208
        %vm2242 = vcmp.gt.f32.partialorder %v2210, 0.0
        %vm2243 = vcmp.gt.f32.partialorder %v2211, 0.0
        %vm2244 = vcmp.gt.f32.partialorder %v2212, 0.0
        %vm2245 = vcmp.gt.f32.partialorder %v2213, 0.0
        %vm2246 = vcmp.gt.f32.partialorder %v2214, 0.0
        %vm2247 = vcmp.gt.f32.partialorder %v2215, 0.0
        %vm2248 = vcmp.gt.f32.partialorder %v2216, 0.0
        %vm2249 = vcmp.gt.f32.partialorder %v2217, 0.0
        %vm2250 = vcmp.gt.f32.partialorder %v2218, 0.0
        %vm2251 = vcmp.gt.f32.partialorder %v2219, 0.0
        %vm2252 = vcmp.gt.f32.partialorder %v2220, 0.0
        %vm2253 = vcmp.gt.f32.partialorder %v2221, 0.0
        %vm2254 = vcmp.gt.f32.partialorder %v2222, 0.0
        %vm2255 = vcmp.gt.f32.partialorder %v2223, 0.0
        %vm2256 = vcmp.gt.f32.partialorder %v2224, 0.0
        %vm2257 = vcmp.gt.f32.partialorder %v2225, 0.0
        %vm2258 = vcmp.gt.f32.partialorder %v2226, 0.0
        %vm2259 = vcmp.gt.f32.partialorder %v2227, 0.0
        %vm2260 = vcmp.gt.f32.partialorder %v2228, 0.0
        %vm2261 = vcmp.gt.f32.partialorder %v2229, 0.0
        %vm2262 = vcmp.gt.f32.partialorder %v2230, 0.0
        %vm2263 = vcmp.gt.f32.partialorder %v2231, 0.0
        %vm2264 = vcmp.gt.f32.partialorder %v2232, 0.0
        %vm2265 = vcmp.gt.f32.partialorder %v2233, 0.0
        %vm2266 = vcmp.gt.f32.partialorder %v2234, 0.0
        %vm2267 = vcmp.gt.f32.partialorder %v2235, 0.0
        %vm2268 = vcmp.gt.f32.partialorder %v2236, 0.0
        %vm2269 = vcmp.gt.f32.partialorder %v2237, 0.0
        %vm2270 = vcmp.gt.f32.partialorder %v2238, 0.0
        %vm2271 = vcmp.gt.f32.partialorder %v2239, 0.0
        %vm2272 = vcmp.gt.f32.partialorder %v2240, 0.0
        %vm2273 = vcmp.gt.f32.partialorder %v2241, 0.0
        %v2274 = vmul.f32 %v2210, 0.001
        %v2275 = vmul.f32 %v2211, 0.001
        %v2276 = vmul.f32 %v2212, 0.001
        %v2277 = vmul.f32 %v2213, 0.001
        %v2278 = vmul.f32 %v2214, 0.001
        %v2279 = vmul.f32 %v2215, 0.001
        %v2280 = vmul.f32 %v2216, 0.001
        %v2281 = vmul.f32 %v2217, 0.001
        %v2282 = vmul.f32 %v2218, 0.001
        %v2283 = vmul.f32 %v2219, 0.001
        %v2284 = vmul.f32 %v2220, 0.001
        %v2285 = vmul.f32 %v2221, 0.001
        %v2286 = vmul.f32 %v2222, 0.001
        %v2287 = vmul.f32 %v2223, 0.001
        %v2288 = vmul.f32 %v2224, 0.001
        %v2289 = vmul.f32 %v2225, 0.001
        %v2290 = vmul.f32 %v2226, 0.001
        %v2291 = vmul.f32 %v2227, 0.001
        %v2292 = vmul.f32 %v2228, 0.001
        %v2293 = vmul.f32 %v2229, 0.001
        %v2294 = vmul.f32 %v2230, 0.001
        %v2295 = vmul.f32 %v2231, 0.001
        %v2296 = vmul.f32 %v2232, 0.001
        %v2297 = vmul.f32 %v2233, 0.001
        %v2298 = vmul.f32 %v2234, 0.001
        %v2299 = vmul.f32 %v2235, 0.001
        %v2300 = vmul.f32 %v2236, 0.001
        %v2301 = vmul.f32 %v2237, 0.001
        %v2302 = vmul.f32 %v2238, 0.001
        %v2303 = vmul.f32 %v2239, 0.001
        %v2304 = vmul.f32 %v2240, 0.001
        %v2305 = vmul.f32 %v2241, 0.001
        %v2306 = vsel %vm2242, %v2210, %v2274
        %v2307 = vsel %vm2243, %v2211, %v2275
        %v2308 = vsel %vm2244, %v2212, %v2276
        %v2309 = vsel %vm2245, %v2213, %v2277
        %v2310 = vsel %vm2246, %v2214, %v2278
        %v2311 = vsel %vm2247, %v2215, %v2279
        %v2312 = vsel %vm2248, %v2216, %v2280
        %v2313 = vsel %vm2249, %v2217, %v2281
        %v2314 = vsel %vm2250, %v2218, %v2282
        %v2315 = vsel %vm2251, %v2219, %v2283
        %v2316 = vsel %vm2252, %v2220, %v2284
        %v2317 = vsel %vm2253, %v2221, %v2285
        %v2318 = vsel %vm2254, %v2222, %v2286
        %v2319 = vsel %vm2255, %v2223, %v2287
        %v2320 = vsel %vm2256, %v2224, %v2288
        %v2321 = vsel %vm2257, %v2225, %v2289
        %v2322 = vsel %vm2258, %v2226, %v2290
        %v2323 = vsel %vm2259, %v2227, %v2291
        %v2324 = vsel %vm2260, %v2228, %v2292
        %v2325 = vsel %vm2261, %v2229, %v2293
        %v2326 = vsel %vm2262, %v2230, %v2294
        %v2327 = vsel %vm2263, %v2231, %v2295
        %v2328 = vsel %vm2264, %v2232, %v2296
        %v2329 = vsel %vm2265, %v2233, %v2297
        %v2330 = vsel %vm2266, %v2234, %v2298
        %v2331 = vsel %vm2267, %v2235, %v2299
        %v2332 = vsel %vm2268, %v2236, %v2300
        %v2333 = vsel %vm2269, %v2237, %v2301
        %v2334 = vsel %vm2270, %v2238, %v2302
        %v2335 = vsel %vm2271, %v2239, %v2303
        %v2336 = vsel %vm2272, %v2240, %v2304
        %v2337 = vsel %vm2273, %v2241, %v2305
        %v2338 = vsel %vm1121, %v2306, 0.0
        %v2339 = vsel %vm1121, %v2307, 0.0
        %v2340 = vadd.f32 %v2338, %v2339
        %v2341 = vsel %vm1121, %v2308, 0.0
        %v2342 = vadd.f32 %v2340, %v2341
        %v2343 = vsel %vm1121, %v2309, 0.0
        %v2344 = vadd.f32 %v2342, %v2343
        %v2345 = vsel %vm1121, %v2310, 0.0
        %v2346 = vadd.f32 %v2344, %v2345
        %v2347 = vsel %vm1121, %v2311, 0.0
        %v2348 = vadd.f32 %v2346, %v2347
        %v2349 = vsel %vm1121, %v2312, 0.0
        %v2350 = vadd.f32 %v2348, %v2349
        %v2351 = vsel %vm1121, %v2313, 0.0
        %v2352 = vadd.f32 %v2350, %v2351
        %v2353 = vsel %vm1121, %v2314, 0.0
        %v2354 = vadd.f32 %v2352, %v2353
        %v2355 = vsel %vm1121, %v2315, 0.0
        %v2356 = vadd.f32 %v2354, %v2355
        %v2357 = vsel %vm1121, %v2316, 0.0
        %v2358 = vadd.f32 %v2356, %v2357
        %v2359 = vsel %vm1121, %v2317, 0.0
        %v2360 = vadd.f32 %v2358, %v2359
        %v2361 = vsel %vm1121, %v2318, 0.0
        %v2362 = vadd.f32 %v2360, %v2361
        %v2363 = vsel %vm1121, %v2319, 0.0
        %v2364 = vadd.f32 %v2362, %v2363
        %v2365 = vsel %vm1121, %v2320, 0.0
        %v2366 = vadd.f32 %v2364, %v2365
        %v2367 = vsel %vm1121, %v2321, 0.0
        %v2368 = vadd.f32 %v2366, %v2367
        %v2369 = vsel %vm1121, %v2322, 0.0
        %v2370 = vadd.f32 %v2368, %v2369
        %v2371 = vsel %vm1121, %v2323, 0.0
        %v2372 = vadd.f32 %v2370, %v2371
        %v2373 = vsel %vm1121, %v2324, 0.0
        %v2374 = vadd.f32 %v2372, %v2373
        %v2375 = vsel %vm1121, %v2325, 0.0
        %v2376 = vadd.f32 %v2374, %v2375
        %v2377 = vsel %vm1121, %v2326, 0.0
        %v2378 = vadd.f32 %v2376, %v2377
        %v2379 = vsel %vm1121, %v2327, 0.0
        %v2380 = vadd.f32 %v2378, %v2379
        %v2381 = vsel %vm1121, %v2328, 0.0
        %v2382 = vadd.f32 %v2380, %v2381
        %v2383 = vsel %vm1121, %v2329, 0.0
        %v2384 = vadd.f32 %v2382, %v2383
        %v2385 = vsel %vm1121, %v2330, 0.0
        %v2386 = vadd.f32 %v2384, %v2385
        %v2387 = vsel %vm1121, %v2331, 0.0
        %v2388 = vadd.f32 %v2386, %v2387
        %v2389 = vsel %vm1121, %v2332, 0.0
        %v2390 = vadd.f32 %v2388, %v2389
        %v2391 = vsel %vm1121, %v2333, 0.0
        %v2392 = vadd.f32 %v2390, %v2391
        %v2393 = vsel %vm1121, %v2334, 0.0
        %v2394 = vadd.f32 %v2392, %v2393
        %v2395 = vsel %vm1121, %v2335, 0.0
        %v2396 = vadd.f32 %v2394, %v2395
        %v2397 = vsel %vm1121, %v2336, 0.0
        %v2398 = vadd.f32 %v2396, %v2397
        %v2399 = vsel %vm1121, %v2337, 0.0
        %v2400 = vadd.f32 %v2398, %v2399
        %v2401 = vrot.slane %v2400, 4
        %v2402 = vadd.f32 %v2400, %v2401
        %v2403 = vrot.slane %v2402, 2
        %v2404 = vadd.f32 %v2402, %v2403
        %v2405 = vrot.slane %v2404, 1
        %v2406 = vadd.f32 %v2404, %v2405
        %v2407 = vmul.f32 %v2406, 0.00390625
        %v2408 = vld [vmem:[%s5] sm:$0xff]
        %v2409 = vld [vmem:[%s5 + $0x8] sm:$0xff]
        %v2410 = vld [vmem:[%s5 + $0x10] sm:$0xff]
        %v2411 = vld [vmem:[%s5 + $0x18] sm:$0xff]
        %v2412 = vld [vmem:[%s6] sm:$0x1]
        %v2414 = vsel %vm1121, %v2407, 0
        %2416 = vmatpush.msra.mxu0 0.0
        %2417 = vmatpush.msra.mxu0 0.0
        %2418 = vmatpush.msra.mxu0 0.0
        %2419 = vmatpush.msra.mxu0 0.0
        %2420 = vmatpush.msra.mxu0 0.0
        %2421 = vmatpush.msra.mxu0 0.0
        %2422 = vmatpush.msra.mxu0 0.0
        %2423 = vmatpush.msra.mxu0 0.0
        %2424 = vmatpush.msra.mxu0 0.0
        %2425 = vmatpush.msra.mxu0 0.0
        %2426 = vmatpush.msra.mxu0 0.0
        %2427 = vmatpush.msra.mxu0 0.0
        %2428 = vmatpush.msra.mxu0 %v2411
        %2429 = vmatpush.msra.mxu0 %v2410
        %2430 = vmatpush.msra.mxu0 %v2409
        %2431 = vmatpush.msra.mxu0 %v2408
        %2432 = vmatmul.f32.gmra.mxu0 %v2414
        %v2433 = vpop.f32.mrf.mxu0
        %v2434 = vadd.f32 %v2412, %v2433
        %2435 = vdwg.mxu0
        %v2436 = vmax.f32 %v2434, 0.0
        %v2437 = vld [vmem:[%s7] sm:$0xff]
        %v2438 = vld [vmem:[%s7 + $0x8] sm:$0xff]
        %v2439 = vld [vmem:[%s7 + $0x10] sm:$0xff]
        %v2440 = vld [vmem:[%s7 + $0x18] sm:$0xff]
        %v2441 = vld [vmem:[%s7 + $0x20] sm:$0xff]
        %v2442 = vld [vmem:[%s7 + $0x28] sm:$0xff]
        %v2443 = vld [vmem:[%s7 + $0x30] sm:$0xff]
        %v2444 = vld [vmem:[%s7 + $0x38] sm:$0xff]
        %v2445 = vld [vmem:[%s8] sm:$0x1]
        %v2447 = vsel %vm1154, %v2436, 0
        %2449 = vmatpush.msra.mxu0 0.0
        %2450 = vmatpush.msra.mxu0 0.0
        %2451 = vmatpush.msra.mxu0 0.0
        %2452 = vmatpush.msra.mxu0 0.0
        %2453 = vmatpush.msra.mxu0 0.0
        %2454 = vmatpush.msra.mxu0 0.0
        %2455 = vmatpush.msra.mxu0 0.0
        %2456 = vmatpush.msra.mxu0 0.0
        %2457 = vmatpush.msra.mxu0 %v2444
        %2458 = vmatpush.msra.mxu0 %v2443
        %2459 = vmatpush.msra.mxu0 %v2442
        %2460 = vmatpush.msra.mxu0 %v2441
        %2461 = vmatpush.msra.mxu0 %v2440
        %2462 = vmatpush.msra.mxu0 %v2439
        %2463 = vmatpush.msra.mxu0 %v2438
        %2464 = vmatpush.msra.mxu0 %v2437
        %2465 = vmatmul.f32.gmra.mxu0 %v2447
        %v2466 = vpop.f32.mrf.mxu0
        %v2467 = vadd.f32 %v2445, %v2466
        %2468 = vdwg.mxu0
        %v2469 = vxor.u32 %v2467, 2147483648
        %v2470 = vmul.f32 %v2469, 1.442695
        %v2471 = vpow.pop %v2470
        %v2472 = vadd.f32 %v2471, 1.0
        %v2473 = vrcp.pop %v2472
        %v2474 = vmul.f32 %v2472, %v2473
        %v2475 = vsub.f32 1.0, %v2474
        %v2476 = vmul.f32 %v2473, %v2475
        %v2477 = vadd.f32 %v2473, %v2476
        %vm2478 = vweird.f32 %v2472
        %vm2479 = vweird.f32 %v2473
        %vm2480 = vmor %vm2478, %vm2479
        %v2481 = vsel %vm2480, %v2473, %v2477
        %v2482 = vand.u32 2147483647, %v2472
        %vm2483 = vcmp.eq.f32.partialorder %v2482, 8.507059e+37
        %v2484 = vand.u32 %v2472, 2147483648
        %v2485 = vor.u32 1.1754944e-38, %v2484
        %v2486 = vsel %vm2483, %v2485, %v2481
        %v2487 = vmul.f32 1.0, %v2486
        %v2488 = vperm.slane %v2487, 0
        %v2489 = vmul.f32 %v2306, %v2488
        %v2490 = vmul.f32 %v2307, %v2488
        %v2491 = vmul.f32 %v2308, %v2488
        %v2492 = vmul.f32 %v2309, %v2488
        %v2493 = vmul.f32 %v2310, %v2488
        %v2494 = vmul.f32 %v2311, %v2488
        %v2495 = vmul.f32 %v2312, %v2488
        %v2496 = vmul.f32 %v2313, %v2488
        %v2497 = vmul.f32 %v2314, %v2488
        %v2498 = vmul.f32 %v2315, %v2488
        %v2499 = vmul.f32 %v2316, %v2488
        %v2500 = vmul.f32 %v2317, %v2488
        %v2501 = vmul.f32 %v2318, %v2488
        %v2502 = vmul.f32 %v2319, %v2488
        %v2503 = vmul.f32 %v2320, %v2488
        %v2504 = vmul.f32 %v2321, %v2488
        %v2505 = vmul.f32 %v2322, %v2488
        %v2506 = vmul.f32 %v2323, %v2488
        %v2507 = vmul.f32 %v2324, %v2488
        %v2508 = vmul.f32 %v2325, %v2488
        %v2509 = vmul.f32 %v2326, %v2488
        %v2510 = vmul.f32 %v2327, %v2488
        %v2511 = vmul.f32 %v2328, %v2488
        %v2512 = vmul.f32 %v2329, %v2488
        %v2513 = vmul.f32 %v2330, %v2488
        %v2514 = vmul.f32 %v2331, %v2488
        %v2515 = vmul.f32 %v2332, %v2488
        %v2516 = vmul.f32 %v2333, %v2488
        %v2517 = vmul.f32 %v2334, %v2488
        %v2518 = vmul.f32 %v2335, %v2488
        %v2519 = vmul.f32 %v2336, %v2488
        %v2520 = vmul.f32 %v2337, %v2488
        %v2521 = vpack.c.bf16 %v2490, %v2489
        %v2522 = vpack.c.bf16 %v2492, %v2491
        %v2523 = vpack.c.bf16 %v2494, %v2493
        %v2524 = vpack.c.bf16 %v2496, %v2495
        %v2525 = vpack.c.bf16 %v2498, %v2497
        %v2526 = vpack.c.bf16 %v2500, %v2499
        %v2527 = vpack.c.bf16 %v2502, %v2501
        %v2528 = vpack.c.bf16 %v2504, %v2503
        %v2529 = vpack.c.bf16 %v2506, %v2505
        %v2530 = vpack.c.bf16 %v2508, %v2507
        %v2531 = vpack.c.bf16 %v2510, %v2509
        %v2532 = vpack.c.bf16 %v2512, %v2511
        %v2533 = vpack.c.bf16 %v2514, %v2513
        %v2534 = vpack.c.bf16 %v2516, %v2515
        %v2535 = vpack.c.bf16 %v2518, %v2517
        %v2536 = vpack.c.bf16 %v2520, %v2519
        %v2537 = vld [vmem:[%s9] sm:$0xf]
        %v2538 = vld [vmem:[%s9 + $0x4] sm:$0xf]
        %v2539 = vld [vmem:[%s9 + $0x8] sm:$0xf]
        %v2540 = vld [vmem:[%s9 + $0xc] sm:$0xf]
        %v2541 = vld [vmem:[%s10] sm:$0x1]
        %v2543 = vperm.slane %v2541, 0
        %v2549 = vunpack.c.l.b16 %v2537
        %v2550 = vunpack.c.l.b16 %v2538
        %v2551 = vunpack.c.l.b16 %v2539
        %v2552 = vunpack.c.l.b16 %v2540
        %v2553 = vpack.c.b16 %v2550, %v2549
        %v2554 = vpack.c.b16 %v2552, %v2551
        %v2558 = vsel %vm1121, %v2521, 0
        %v2561 = vsel %vm1121, %v2522, 0
        %v2564 = vsel %vm1121, %v2523, 0
        %v2567 = vsel %vm1121, %v2524, 0
        %v2570 = vsel %vm1121, %v2525, 0
        %v2573 = vsel %vm1121, %v2526, 0
        %v2576 = vsel %vm1121, %v2527, 0
        %v2579 = vsel %vm1121, %v2528, 0
        %v2582 = vsel %vm1121, %v2529, 0
        %v2585 = vsel %vm1121, %v2530, 0
        %v2588 = vsel %vm1121, %v2531, 0
        %v2591 = vsel %vm1121, %v2532, 0
        %v2594 = vsel %vm1121, %v2533, 0
        %v2597 = vsel %vm1121, %v2534, 0
        %v2600 = vsel %vm1121, %v2535, 0
        %v2603 = vsel %vm1121, %v2536, 0
        %2605 = vmatpush.bf16.msra.mxu0 0
        %2606 = vmatpush.bf16.msra.mxu0 0
        %2607 = vmatpush.bf16.msra.mxu0 0
        %2608 = vmatpush.bf16.msra.mxu0 0
        %2609 = vmatpush.bf16.msra.mxu0 0
        %2610 = vmatpush.bf16.msra.mxu0 0
        %2611 = vmatpush.bf16.msra.mxu0 %v2554
        %2612 = vmatpush.bf16.msra.mxu0 %v2553
        %2613 = vmatmul.bf16.gmra.mxu0 %v2558
        %v2614 = vpop.f32.mrf.mxu0
        %v2615 = vadd.f32 %v2543, %v2614
        %v2616 = vpop.f32.mrf.mxu0
        %v2617 = vadd.f32 %v2543, %v2616
        %2618 = vmatmul.bf16.gmra.mxu0 %v2561
        %v2619 = vpop.f32.mrf.mxu0
        %v2620 = vadd.f32 %v2543, %v2619
        %v2621 = vpop.f32.mrf.mxu0
        %v2622 = vadd.f32 %v2543, %v2621
        %2623 = vmatmul.bf16.gmra.mxu0 %v2564
        %v2624 = vpop.f32.mrf.mxu0
        %v2625 = vadd.f32 %v2543, %v2624
        %v2626 = vpop.f32.mrf.mxu0
        %v2627 = vadd.f32 %v2543, %v2626
        %2628 = vmatmul.bf16.gmra.mxu0 %v2567
        %v2629 = vpop.f32.mrf.mxu0
        %v2630 = vadd.f32 %v2543, %v2629
        %v2631 = vpop.f32.mrf.mxu0
        %v2632 = vadd.f32 %v2543, %v2631
        %2633 = vmatmul.bf16.gmra.mxu0 %v2570
        %v2634 = vpop.f32.mrf.mxu0
        %v2635 = vadd.f32 %v2543, %v2634
        %v2636 = vpop.f32.mrf.mxu0
        %v2637 = vadd.f32 %v2543, %v2636
        %2638 = vmatmul.bf16.gmra.mxu0 %v2573
        %v2639 = vpop.f32.mrf.mxu0
        %v2640 = vadd.f32 %v2543, %v2639
        %v2641 = vpop.f32.mrf.mxu0
        %v2642 = vadd.f32 %v2543, %v2641
        %2643 = vmatmul.bf16.gmra.mxu0 %v2576
        %v2644 = vpop.f32.mrf.mxu0
        %v2645 = vadd.f32 %v2543, %v2644
        %v2646 = vpop.f32.mrf.mxu0
        %v2647 = vadd.f32 %v2543, %v2646
        %2648 = vmatmul.bf16.gmra.mxu0 %v2579
        %v2649 = vpop.f32.mrf.mxu0
        %v2650 = vadd.f32 %v2543, %v2649
        %v2651 = vpop.f32.mrf.mxu0
        %v2652 = vadd.f32 %v2543, %v2651
        %2653 = vmatmul.bf16.gmra.mxu0 %v2582
        %v2654 = vpop.f32.mrf.mxu0
        %v2655 = vadd.f32 %v2543, %v2654
        %v2656 = vpop.f32.mrf.mxu0
        %v2657 = vadd.f32 %v2543, %v2656
        %2658 = vmatmul.bf16.gmra.mxu0 %v2585
        %v2659 = vpop.f32.mrf.mxu0
        %v2660 = vadd.f32 %v2543, %v2659
        %v2661 = vpop.f32.mrf.mxu0
        %v2662 = vadd.f32 %v2543, %v2661
        %2663 = vmatmul.bf16.gmra.mxu0 %v2588
        %v2664 = vpop.f32.mrf.mxu0
        %v2665 = vadd.f32 %v2543, %v2664
        %v2666 = vpop.f32.mrf.mxu0
        %v2667 = vadd.f32 %v2543, %v2666
        %2668 = vmatmul.bf16.gmra.mxu0 %v2591
        %v2669 = vpop.f32.mrf.mxu0
        %v2670 = vadd.f32 %v2543, %v2669
        %v2671 = vpop.f32.mrf.mxu0
        %v2672 = vadd.f32 %v2543, %v2671
        %2673 = vmatmul.bf16.gmra.mxu0 %v2594
        %v2674 = vpop.f32.mrf.mxu0
        %v2675 = vadd.f32 %v2543, %v2674
        %v2676 = vpop.f32.mrf.mxu0
        %v2677 = vadd.f32 %v2543, %v2676
        %2678 = vmatmul.bf16.gmra.mxu0 %v2597
        %v2679 = vpop.f32.mrf.mxu0
        %v2680 = vadd.f32 %v2543, %v2679
        %v2681 = vpop.f32.mrf.mxu0
        %v2682 = vadd.f32 %v2543, %v2681
        %2683 = vmatmul.bf16.gmra.mxu0 %v2600
        %v2684 = vpop.f32.mrf.mxu0
        %v2685 = vadd.f32 %v2543, %v2684
        %v2686 = vpop.f32.mrf.mxu0
        %v2687 = vadd.f32 %v2543, %v2686
        %2688 = vmatmul.bf16.gmra.mxu0 %v2603
        %v2689 = vpop.f32.mrf.mxu0
        %v2690 = vadd.f32 %v2543, %v2689
        %v2691 = vpop.f32.mrf.mxu0
        %v2692 = vadd.f32 %v2543, %v2691
        %2693 = vdwg.mxu0
        %v2694 = vadd.f32 %v2615, %v408
        %v2695 = vadd.f32 %v2617, %v409
        %v2696 = vadd.f32 %v2620, %v410
        %v2697 = vadd.f32 %v2622, %v411
        %v2698 = vadd.f32 %v2625, %v412
        %v2699 = vadd.f32 %v2627, %v413
        %v2700 = vadd.f32 %v2630, %v414
        %v2701 = vadd.f32 %v2632, %v415
        %v2702 = vadd.f32 %v2635, %v416
        %v2703 = vadd.f32 %v2637, %v417
        %v2704 = vadd.f32 %v2640, %v418
        %v2705 = vadd.f32 %v2642, %v419
        %v2706 = vadd.f32 %v2645, %v420
        %v2707 = vadd.f32 %v2647, %v421
        %v2708 = vadd.f32 %v2650, %v422
        %v2709 = vadd.f32 %v2652, %v423
        %v2710 = vadd.f32 %v2655, %v424
        %v2711 = vadd.f32 %v2657, %v425
        %v2712 = vadd.f32 %v2660, %v426
        %v2713 = vadd.f32 %v2662, %v427
        %v2714 = vadd.f32 %v2665, %v428
        %v2715 = vadd.f32 %v2667, %v429
        %v2716 = vadd.f32 %v2670, %v430
        %v2717 = vadd.f32 %v2672, %v431
        %v2718 = vadd.f32 %v2675, %v432
        %v2719 = vadd.f32 %v2677, %v433
        %v2720 = vadd.f32 %v2680, %v434
        %v2721 = vadd.f32 %v2682, %v435
        %v2722 = vadd.f32 %v2685, %v436
        %v2723 = vadd.f32 %v2687, %v437
        %v2724 = vadd.f32 %v2690, %v438
        %v2725 = vadd.f32 %v2692, %v439
        %v2726 = vmax.f32 %v2694, 0.0
        %v2727 = vmax.f32 %v2695, 0.0
        %v2728 = vmax.f32 %v2696, 0.0
        %v2729 = vmax.f32 %v2697, 0.0
        %v2730 = vmax.f32 %v2698, 0.0
        %v2731 = vmax.f32 %v2699, 0.0
        %v2732 = vmax.f32 %v2700, 0.0
        %v2733 = vmax.f32 %v2701, 0.0
        %v2734 = vmax.f32 %v2702, 0.0
        %v2735 = vmax.f32 %v2703, 0.0
        %v2736 = vmax.f32 %v2704, 0.0
        %v2737 = vmax.f32 %v2705, 0.0
        %v2738 = vmax.f32 %v2706, 0.0
        %v2739 = vmax.f32 %v2707, 0.0
        %v2740 = vmax.f32 %v2708, 0.0
        %v2741 = vmax.f32 %v2709, 0.0
        %v2742 = vmax.f32 %v2710, 0.0
        %v2743 = vmax.f32 %v2711, 0.0
        %v2744 = vmax.f32 %v2712, 0.0
        %v2745 = vmax.f32 %v2713, 0.0
        %v2746 = vmax.f32 %v2714, 0.0
        %v2747 = vmax.f32 %v2715, 0.0
        %v2748 = vmax.f32 %v2716, 0.0
        %v2749 = vmax.f32 %v2717, 0.0
        %v2750 = vmax.f32 %v2718, 0.0
        %v2751 = vmax.f32 %v2719, 0.0
        %v2752 = vmax.f32 %v2720, 0.0
        %v2753 = vmax.f32 %v2721, 0.0
        %v2754 = vmax.f32 %v2722, 0.0
        %v2755 = vmax.f32 %v2723, 0.0
        %v2756 = vmax.f32 %v2724, 0.0
        %v2757 = vmax.f32 %v2725, 0.0
        %2758 = vst [vmem:[%s406] sm:$0xff] %v2726
        %2759 = vst [vmem:[%s406 + $0x8] sm:$0xff] %v2727
        %2760 = vst [vmem:[%s406 + $0x10] sm:$0xff] %v2728
        %2761 = vst [vmem:[%s406 + $0x18] sm:$0xff] %v2729
        %2762 = vst [vmem:[%s406 + $0x20] sm:$0xff] %v2730
        %2763 = vst [vmem:[%s406 + $0x28] sm:$0xff] %v2731
        %2764 = vst [vmem:[%s406 + $0x30] sm:$0xff] %v2732
        %2765 = vst [vmem:[%s406 + $0x38] sm:$0xff] %v2733
        %2766 = vst [vmem:[%s406 + $0x40] sm:$0xff] %v2734
        %2767 = vst [vmem:[%s406 + $0x48] sm:$0xff] %v2735
        %2768 = vst [vmem:[%s406 + $0x50] sm:$0xff] %v2736
        %2769 = vst [vmem:[%s406 + $0x58] sm:$0xff] %v2737
        %2770 = vst [vmem:[%s406 + $0x60] sm:$0xff] %v2738
        %2771 = vst [vmem:[%s406 + $0x68] sm:$0xff] %v2739
        %2772 = vst [vmem:[%s406 + $0x70] sm:$0xff] %v2740
        %2773 = vst [vmem:[%s406 + $0x78] sm:$0xff] %v2741
        %2774 = vst [vmem:[%s406 + $0x80] sm:$0xff] %v2742
        %2775 = vst [vmem:[%s406 + $0x88] sm:$0xff] %v2743
        %2776 = vst [vmem:[%s406 + $0x90] sm:$0xff] %v2744
        %2777 = vst [vmem:[%s406 + $0x98] sm:$0xff] %v2745
        %2778 = vst [vmem:[%s406 + $0xa0] sm:$0xff] %v2746
        %2779 = vst [vmem:[%s406 + $0xa8] sm:$0xff] %v2747
        %2780 = vst [vmem:[%s406 + $0xb0] sm:$0xff] %v2748
        %2781 = vst [vmem:[%s406 + $0xb8] sm:$0xff] %v2749
        %2782 = vst [vmem:[%s406 + $0xc0] sm:$0xff] %v2750
        %2783 = vst [vmem:[%s406 + $0xc8] sm:$0xff] %v2751
        %2784 = vst [vmem:[%s406 + $0xd0] sm:$0xff] %v2752
        %2785 = vst [vmem:[%s406 + $0xd8] sm:$0xff] %v2753
        %2786 = vst [vmem:[%s406 + $0xe0] sm:$0xff] %v2754
        %2787 = vst [vmem:[%s406 + $0xe8] sm:$0xff] %v2755
        %2788 = vst [vmem:[%s406 + $0xf0] sm:$0xff] %v2756
        %2789 = vst [vmem:[%s406 + $0xf8] sm:$0xff] %v2757
        %s2790 = sand.u32 %s272, 1
        %s2791 = scalar_lea.sflag [#allocation4], %s2790
        %s2792 = sand.u32 %s272, 1
        %s2793 = smul.addr %s2792, 256
        %s2794 = scalar_lea.vmem [#allocation5], %s2793
        // Predicated region
        $region69: #{tpu_custom_call.1} parent=63 // pred_check
          %p2795 = pneg %p282
        $region70: #{tpu_custom_call.1} parent=63 // pred_check_branch
          %2797 = sbr.rel (%p2795) target = $region72
        $region71: #{tpu_custom_call.1} parent=63 // pred_region
          %2799 = vsyncadd %s2791, 0
          %s2800 = smul.addr %s28, 32
          %s2801 = smul.addr %s2800, 8
          %s2802 = scalar_lea.hbm %s11, %s2801
          %s2803 = sshll.u32 %s2794, 4
          %s2804 = int_to_ptr.vmem [resolvable:$true] %s2803
          %s2805 = sshll.u32 %s2802, 4
          %s2806 = int_to_ptr.hbm [resolvable:$true] %s2805
          %2811 = dma.vmem_to_hbm [thread:$0]  %s2804, 4096, %s2806, %s2791, 128, 128, 8
        $region72: #{tpu_custom_call.1} parent=63 // pred_fallthru
          _
      $region64: #{tpu_custom_call.1} parent=5 // pred_fallthru
        _
      %p2812 = scmp.le.s32.totalorder 2, %s23
      // Predicated region
      $region73: #{tpu_custom_call.1} parent=5 // pred_check
        %p2813 = pneg %p2812
      $region74: #{tpu_custom_call.1} parent=5 // pred_check_branch
        %2815 = sbr.rel (%p2813) target = $region76
      $region75: #{tpu_custom_call.1} parent=5 // pred_region
        %s2816 = ssub.s32 %s23, 2
        // Predicated region
        $region77: #{tpu_custom_call.1} parent=75 // pred_check
          %p2817 = pneg %p288
        $region78: #{tpu_custom_call.1} parent=75 // pred_check_branch
          %2819 = sbr.rel (%p2817) target = $region80
        $region79: #{tpu_custom_call.1} parent=75 // pred_region
          %s2820 = sand.u32 %s273, 1
          %s2821 = scalar_lea.sflag [#allocation4], %s2820
          %s2822 = sand.u32 %s273, 1
          %s2823 = smul.addr %s2822, 256
          %s2824 = scalar_lea.vmem [#allocation5], %s2823
          %2826 = dma.done %s2821, 4096
        $region80: #{tpu_custom_call.1} parent=75 // pred_fallthru
          _
      $region76: #{tpu_custom_call.1} parent=5 // pred_fallthru
        _
    $region6: #{tpu_custom_call.1} parent=1 // loop_footer
      %s27 = sadd.s32 1, %s23
    $region7: #{tpu_custom_call.1} parent=1 // loop_footer_branch
      %22 = sbr.rel target = $region3
    $region8: #{tpu_custom_call.1} parent=1 // loop_exit
      _
    %2827 = vsyncpa [#allocation3], 1
    %s2828 = scalar_lea.sflag [#allocation3], 1
    %2829 = vsyncpa %s2828, 1
    %2830 = vsyncpa [#allocation4], 1
    %s2831 = scalar_lea.sflag [#allocation4], 1
    %2832 = vsyncpa %s2831, 1

</llo_original>
